<compile_context>
chip_gen: v6e
topology: v6e:2x2x1
jax: 0.10.0
libtpu: 0.0.40
codegen_flags: <defaults>
</compile_context>

<pallas_src>
import functools

import jax
import jax.numpy as jnp
from jax.experimental import pallas as pl
from jax.experimental.pallas import tpu as pltpu

# -------- small, module-consistent shapes --------
B = 16             # batch of sentence pairs (small; exercises the chunk grid)
CHUNK = 8          # sentence pairs per grid step (multiple of 8 sublanes)
H = 64             # transformer_dim (stand-in for 768)
D1, D2 = 128, 128  # hidden_dims (stand-in for [1024, 1024])
MC = 8             # mc_samples (stand-in for 60)
TARGET_RANGE = (0.0, 1.0)
DELTA_T = 0.01     # only used by integration_forward in the original module


# ----------------------------------------------------------------------------
# Pallas kernel: st_forward normalization + learned_pdf_mc_mlp.forward
# One grid step handles CHUNK sentence pairs; all (1+MC) t evaluations of those
# pairs go through a single [(1+MC)*CHUNK, D1] x [D1, D2] matmul.
# ----------------------------------------------------------------------------
def _pdf_kernel(s1_ref, s2_ref, tcol_ref, oh_ref, ohq_t_ref, ohmc_t_ref,
                w1x_ref, w1t_ref, b1_ref,
                w2_ref, b2_ref,
                w3_ref, b3_ref,
                out_ref,
                *, t_width, mc_samples):
    s1 = s1_ref[...]                                     # [CB, H] f32
    s2 = s2_ref[...]                                     # [CB, H] f32

    # --- st_forward: s1 * s2 / sqrt(dot(s1,s1) * dot(s2,s2)) ---
    d11 = jnp.sum(s1 * s1, axis=1, keepdims=True)        # [CB, 1]
    d22 = jnp.sum(s2 * s2, axis=1, keepdims=True)        # [CB, 1]
    x = s1 * s2 * jax.lax.rsqrt(d11 * d22)               # [CB, H] f32

    # --- learned_pdf_mc_mlp.forward(x, t), batched over all t values ---
    # layer 1, x-part: once per pair (bf16 matmul inputs, f32 accumulate)
    h1x = jnp.dot(x.astype(jnp.bfloat16), w1x_ref[...],
                  preferred_element_type=jnp.float32)    # [CB, D1] f32

    # Replicate each pair's h1x over its (1 + MC) t-rows with a one-hot matmul,
    # add the t column of W1 and the bias, ReLU.  Row order: r = pair*(1+MC)+j,
    # j == 0 is the query t, j >= 1 are the MC sample t's.
    oh = oh_ref[...]                                     # [N, CB] f32 one-hot
    h1 = jnp.maximum(
        jnp.dot(oh, h1x, preferred_element_type=jnp.float32)
        + tcol_ref[...] * w1t_ref[...] + b1_ref[...], 0.0)        # [N, D1] f32

    # layer 2: one big matmul over all N = (1+MC)*CB rows.
    h2 = jnp.maximum(
        jnp.dot(h1.astype(jnp.bfloat16), w2_ref[...],
                preferred_element_type=jnp.float32) + b2_ref[...], 0.0)  # [N, D2]

    # output layer: lane reduction against w3 (row form) + bias.
    score = jnp.sum(h2 * w3_ref[...], axis=1, keepdims=True) + b3_ref[...]  # [N, 1]

    # Per-pair max shift before exp (cancels exactly in the pdf ratio, prevents
    # f32 exp overflow).
    seg_scores = score + (oh - 1.0) * 1e30               # [N, CB]; off-segment ~ -1e30
    m_pair = jnp.max(seg_scores, axis=0, keepdims=True)  # [1, CB]
    m_row = jnp.sum(oh * m_pair, axis=1, keepdims=True)  # [N, 1]
    e = jnp.exp(score - m_row)                           # [N, 1]

    # Gather the query term and the MC normalizer of each pair.
    e_q = jnp.dot(ohq_t_ref[...], e, preferred_element_type=jnp.float32)   # [CB, 1]
    z_sum = jnp.dot(ohmc_t_ref[...], e, preferred_element_type=jnp.float32)  # [CB, 1]

    # pdf = exp(score_q) / ((t_width / MC) * sum_i exp(score_mc_i))
    out_ref[...] = e_q * (float(mc_samples) / t_width) / z_sum


def forward(s1_vec, s2_vec, t, t_mc, params, *, chunk_pairs=CHUNK):
    """forward(encoded_s1, encoded_s2, t) with the transformer CLS vectors given."""
    w1x, w1t, b1, w2, b2, w3, b3 = params
    bsz, h_dim = s1_vec.shape
    d1 = w1x.shape[1]
    d2 = w2.shape[1]
    mc = int(t_mc.shape[0])
    assert mc >= 1, "mc_samples must be >= 1"
    assert bsz % chunk_pairs == 0, "batch must be a multiple of the chunk size"
    mc1 = mc + 1
    n_chunk = chunk_pairs * mc1
    n_chunks = bsz // chunk_pairs

    t = t.astype(jnp.float32)
    t_mc = t_mc.astype(jnp.float32)

    # Per-row t values; row r = pair*(1+MC) + j (j == 0 -> query t of that pair).
    t_all = jnp.concatenate(
        [t[:, None], jnp.broadcast_to(t_mc[None, :], (bsz, mc))], axis=1)  # [B, 1+MC]
    t_col = t_all.reshape(bsz * mc1, 1)                                    # [B*(1+MC), 1]

    # Chunk-local segment one-hots (identical for every chunk -> loaded once).
    rows = jnp.arange(n_chunk)
    seg = rows // mc1
    oh = (seg[:, None] == jnp.arange(chunk_pairs)[None, :]).astype(jnp.float32)  # [N, CB]
    is_q = (rows % mc1 == 0).astype(jnp.float32)[:, None]                        # [N, 1]
    ohq_t = (oh * is_q).T            # [CB, N]: picks the query row of each pair
    ohmc_t = (oh * (1.0 - is_q)).T   # [CB, N]: sums the MC rows of each pair

    kernel = functools.partial(
        _pdf_kernel,
        t_width=float(TARGET_RANGE[1] - TARGET_RANGE[0]),
        mc_samples=mc,
    )

    # Weights / one-hots: full-array blocks with a constant index map -> resident
    # in VMEM across the whole grid (weight load amortized over all pairs).
    def resident(shape):
        return pl.BlockSpec(shape, lambda i: (0, 0))

    out = pl.pallas_call(
        kernel,
        out_shape=jax.ShapeDtypeStruct((bsz, 1), jnp.float32),
        grid=(n_chunks,),
        in_specs=[
            pl.BlockSpec((chunk_pairs, h_dim), lambda i: (i, 0)),   # s1
            pl.BlockSpec((chunk_pairs, h_dim), lambda i: (i, 0)),   # s2
            pl.BlockSpec((n_chunk, 1), lambda i: (i, 0)),           # t_col
            resident((n_chunk, chunk_pairs)),                       # oh
            resident((chunk_pairs, n_chunk)),                       # ohq_t
            resident((chunk_pairs, n_chunk)),                       # ohmc_t
            resident((h_dim, d1)),                                  # w1x (bf16)
            resident((1, d1)),                                      # w1t
            resident((1, d1)),                                      # b1
            resident((d1, d2)),                                     # w2 (bf16)
            resident((1, d2)),                                      # b2
            resident((1, d2)),                                      # w3
            resident((1, 1)),                                       # b3
        ],
        out_specs=pl.BlockSpec((chunk_pairs, 1), lambda i: (i, 0)),
        compiler_params=pltpu.CompilerParams(
            dimension_semantics=("parallel",),        # chunks split across TCs (v7x)
            vmem_limit_bytes=64 * 1024 * 1024),       # explicit budget (v7x headroom)
    )(s1_vec.astype(jnp.float32), s2_vec.astype(jnp.float32), t_col,
      oh, ohq_t, ohmc_t,
      w1x.astype(jnp.bfloat16), w1t, b1,
      w2.astype(jnp.bfloat16), b2, w3, b3)
    return out[:, 0]                                   # [B] pdf values


# ----------------------------------------------------------------------------
# deterministic parameter init (mimics torch.nn.Linear default U(-k, k))
# ----------------------------------------------------------------------------
def init_params(key):
    def linear(key, fan_in, shape):
        k = 1.0 / jnp.sqrt(jnp.float32(fan_in))
        return jax.random.uniform(key, shape, jnp.float32, -k, k)

    ks = jax.random.split(key, 6)
    w1 = linear(ks[0], H + 1, (H + 1, D1))   # layer 1 on concat([x, t])
    b1 = linear(ks[1], H + 1, (1, D1))
    w2 = linear(ks[2], D1, (D1, D2))
    b2 = linear(ks[3], D1, (1, D2))
    w3 = linear(ks[4], D2, (1, D2))          # output layer weight (row form)
    b3 = linear(ks[5], D2, (1, 1))
    w1x = w1[:H, :]                          # [H, D1]
    w1t = w1[H:H + 1, :]                     # [1, D1]
    return (w1x, w1t, b1, w2, b2, w3, b3)


# pure-JAX f32 reference of the same math (for a sanity check)
def reference_forward(s1, s2, t, t_mc, params):
    w1x, w1t, b1, w2, b2, w3, b3 = params
    x = s1 * s2 / jnp.sqrt((s1 * s1).sum(1) * (s2 * s2).sum(1))[:, None]

    def score(tt):
        h1 = jax.nn.relu(x @ w1x + tt * w1t + b1)
        h2 = jax.nn.relu(h1 @ w2 + b2)
        return (h2 * w3).sum(1, keepdims=True) + b3

    e_q = jnp.exp(score(t[:, None]))
    e_mc = sum(jnp.exp(score(t_mc[j])) for j in range(t_mc.shape[0]))
    z = (TARGET_RANGE[1] - TARGET_RANGE[0]) / t_mc.shape[0] * e_mc
    return (e_q / z)[:, 0]


if __name__ == "__main__":
    key = jax.random.PRNGKey(0)
    k1, k2, k3, k4 = jax.random.split(key, 4)

    # stand-in transformer CLS outputs for the two sentence batches
    s1_vec = jax.random.normal(k1, (B, H), jnp.float32)
    s2_vec = jax.random.normal(k2, (B, H), jnp.float32)
    # query target t per pair, within target_range
    t = jax.random.uniform(k3, (B,), jnp.float32,
                           TARGET_RANGE[0], TARGET_RANGE[1])
    # deterministic Monte-Carlo sample points over t_range
    t_mc = jax.random.uniform(k4, (MC,), jnp.float32,
                              TARGET_RANGE[0], TARGET_RANGE[1])

    params = init_params(jax.random.PRNGKey(123))  # torch_seed = 123

    out = jax.block_until_ready(forward(s1_vec, s2_vec, t, t_mc, params))
    ref = jax.block_until_ready(reference_forward(s1_vec, s2_vec, t, t_mc, params))

    assert out.shape == (B,)
    assert bool(jnp.allclose(out, ref, rtol=5e-2, atol=1e-3)), (out, ref)

    print("KERNEL_OK")
</pallas_src>

<mosaic_0001>
module attributes {stable_mosaic.version = 11 : i64} {
  func.func @_pdf_kernel(%arg0: i32, %arg1: memref<8x64xf32, #tpu.memory_space<vmem>>, %arg2: memref<8x64xf32, #tpu.memory_space<vmem>>, %arg3: memref<72x1xf32, #tpu.memory_space<vmem>>, %arg4: memref<72x8xf32, #tpu.memory_space<vmem>>, %arg5: memref<8x72xf32, #tpu.memory_space<vmem>>, %arg6: memref<8x72xf32, #tpu.memory_space<vmem>>, %arg7: memref<64x128xbf16, #tpu.memory_space<vmem>>, %arg8: memref<1x128xf32, #tpu.memory_space<vmem>>, %arg9: memref<1x128xf32, #tpu.memory_space<vmem>>, %arg10: memref<128x128xbf16, #tpu.memory_space<vmem>>, %arg11: memref<1x128xf32, #tpu.memory_space<vmem>>, %arg12: memref<1x128xf32, #tpu.memory_space<vmem>>, %arg13: memref<1x1xf32, #tpu.memory_space<vmem>>, %arg14: memref<8x1xf32, #tpu.memory_space<vmem>>) attributes {dimension_semantics = [#tpu.dimension_semantics<parallel>], iteration_bounds = array<i64: 2>, scalar_prefetch = 0 : i64, scratch_operands = 0 : i64, tpu.core_type = #tpu.core_type<tc>, window_params = [{transform_indices = @transform_0, window_bounds = array<i64: 8, 64>}, {transform_indices = @transform_1, window_bounds = array<i64: 8, 64>}, {transform_indices = @transform_2, window_bounds = array<i64: 72, 1>}, {pipeline_mode = #tpu.pipeline_mode<synchronous>, transform_indices = @transform_3, window_bounds = array<i64: 72, 8>}, {pipeline_mode = #tpu.pipeline_mode<synchronous>, transform_indices = @transform_4, window_bounds = array<i64: 8, 72>}, {pipeline_mode = #tpu.pipeline_mode<synchronous>, transform_indices = @transform_5, window_bounds = array<i64: 8, 72>}, {pipeline_mode = #tpu.pipeline_mode<synchronous>, transform_indices = @transform_6, window_bounds = array<i64: 64, 128>}, {pipeline_mode = #tpu.pipeline_mode<synchronous>, transform_indices = @transform_7, window_bounds = array<i64: 1, 128>}, {pipeline_mode = #tpu.pipeline_mode<synchronous>, transform_indices = @transform_8, window_bounds = array<i64: 1, 128>}, {pipeline_mode = #tpu.pipeline_mode<synchronous>, transform_indices = @transform_9, window_bounds = array<i64: 128, 128>}, {pipeline_mode = #tpu.pipeline_mode<synchronous>, transform_indices = @transform_10, window_bounds = array<i64: 1, 128>}, {pipeline_mode = #tpu.pipeline_mode<synchronous>, transform_indices = @transform_11, window_bounds = array<i64: 1, 128>}, {pipeline_mode = #tpu.pipeline_mode<synchronous>, transform_indices = @transform_12, window_bounds = array<i64: 1, 1>}, {transform_indices = @transform_13, window_bounds = array<i64: 8, 1>}]} {
    %c0 = arith.constant 0 : index
    %c0_0 = arith.constant 0 : index
    %0 = vector.load %arg1[%c0, %c0_0] : memref<8x64xf32, #tpu.memory_space<vmem>>, vector<8x64xf32>
    %c0_1 = arith.constant 0 : index
    %c0_2 = arith.constant 0 : index
    %1 = vector.load %arg2[%c0_1, %c0_2] : memref<8x64xf32, #tpu.memory_space<vmem>>, vector<8x64xf32>
    %2 = arith.mulf %0, %0 : vector<8x64xf32>
    %cst = arith.constant dense<0.000000e+00> : vector<8xf32>
    %3 = vector.multi_reduction <add>, %2, %cst [1] : vector<8x64xf32> to vector<8xf32>
    %4 = vector.shape_cast %3 : vector<8xf32> to vector<8x1xf32>
    %5 = arith.mulf %1, %1 : vector<8x64xf32>
    %cst_3 = arith.constant dense<0.000000e+00> : vector<8xf32>
    %6 = vector.multi_reduction <add>, %5, %cst_3 [1] : vector<8x64xf32> to vector<8xf32>
    %7 = vector.shape_cast %6 : vector<8xf32> to vector<8x1xf32>
    %8 = arith.mulf %0, %1 : vector<8x64xf32>
    %9 = arith.mulf %4, %7 : vector<8x1xf32>
    %10 = math.rsqrt %9 : vector<8x1xf32>
    %11 = vector.broadcast %10 : vector<8x1xf32> to vector<8x64xf32>
    %12 = arith.mulf %8, %11 : vector<8x64xf32>
    %13 = arith.truncf %12 : vector<8x64xf32> to vector<8x64xbf16>
    %c0_4 = arith.constant 0 : index
    %c0_5 = arith.constant 0 : index
    %14 = vector.load %arg7[%c0_4, %c0_5] : memref<64x128xbf16, #tpu.memory_space<vmem>>, vector<64x128xbf16>
    %cst_6 = arith.constant dense<0.000000e+00> : vector<8x128xf32>
    %15 = tpu.matmul %13, %14, %cst_6 {dimension_numbers = #tpu.dot_dimension_numbers<[1], [0], [0], [1], [0, 0, 1, 1], [], []>} : vector<8x64xbf16>, vector<64x128xbf16>, vector<8x128xf32> -> vector<8x128xf32>
    %c0_7 = arith.constant 0 : index
    %c0_8 = arith.constant 0 : index
    %16 = vector.load %arg4[%c0_7, %c0_8] : memref<72x8xf32, #tpu.memory_space<vmem>>, vector<72x8xf32>
    %cst_9 = arith.constant dense<0.000000e+00> : vector<72x128xf32>
    %17 = tpu.matmul %16, %15, %cst_9 {dimension_numbers = #tpu.dot_dimension_numbers<[1], [0], [0], [1], [0, 0, 1, 1], [], []>} : vector<72x8xf32>, vector<8x128xf32>, vector<72x128xf32> -> vector<72x128xf32>
    %c0_10 = arith.constant 0 : index
    %c0_11 = arith.constant 0 : index
    %18 = vector.load %arg3[%c0_10, %c0_11] : memref<72x1xf32, #tpu.memory_space<vmem>>, vector<72x1xf32>
    %c0_12 = arith.constant 0 : index
    %c0_13 = arith.constant 0 : index
    %19 = vector.load %arg8[%c0_12, %c0_13] : memref<1x128xf32, #tpu.memory_space<vmem>>, vector<1x128xf32>
    %20 = vector.broadcast %18 : vector<72x1xf32> to vector<72x128xf32>
    %21 = vector.broadcast %19 : vector<1x128xf32> to vector<72x128xf32>
    %22 = arith.mulf %20, %21 : vector<72x128xf32>
    %23 = arith.addf %17, %22 : vector<72x128xf32>
    %c0_14 = arith.constant 0 : index
    %c0_15 = arith.constant 0 : index
    %24 = vector.load %arg9[%c0_14, %c0_15] : memref<1x128xf32, #tpu.memory_space<vmem>>, vector<1x128xf32>
    %25 = vector.broadcast %24 : vector<1x128xf32> to vector<72x128xf32>
    %26 = arith.addf %23, %25 : vector<72x128xf32>
    %cst_16 = arith.constant 0.000000e+00 : f32
    %27 = vector.broadcast %cst_16 : f32 to vector<72x128xf32>
    %28 = arith.maximumf %26, %27 : vector<72x128xf32>
    %29 = arith.truncf %28 : vector<72x128xf32> to vector<72x128xbf16>
    %c0_17 = arith.constant 0 : index
    %c0_18 = arith.constant 0 : index
    %30 = vector.load %arg10[%c0_17, %c0_18] : memref<128x128xbf16, #tpu.memory_space<vmem>>, vector<128x128xbf16>
    %cst_19 = arith.constant dense<0.000000e+00> : vector<72x128xf32>
    %31 = tpu.matmul %29, %30, %cst_19 {dimension_numbers = #tpu.dot_dimension_numbers<[1], [0], [0], [1], [0, 0, 1, 1], [], []>} : vector<72x128xbf16>, vector<128x128xbf16>, vector<72x128xf32> -> vector<72x128xf32>
    %c0_20 = arith.constant 0 : index
    %c0_21 = arith.constant 0 : index
    %32 = vector.load %arg11[%c0_20, %c0_21] : memref<1x128xf32, #tpu.memory_space<vmem>>, vector<1x128xf32>
    %33 = vector.broadcast %32 : vector<1x128xf32> to vector<72x128xf32>
    %34 = arith.addf %31, %33 : vector<72x128xf32>
    %cst_22 = arith.constant 0.000000e+00 : f32
    %35 = vector.broadcast %cst_22 : f32 to vector<72x128xf32>
    %36 = arith.maximumf %34, %35 : vector<72x128xf32>
    %c0_23 = arith.constant 0 : index
    %c0_24 = arith.constant 0 : index
    %37 = vector.load %arg12[%c0_23, %c0_24] : memref<1x128xf32, #tpu.memory_space<vmem>>, vector<1x128xf32>
    %38 = vector.broadcast %37 : vector<1x128xf32> to vector<72x128xf32>
    %39 = arith.mulf %36, %38 : vector<72x128xf32>
    %cst_25 = arith.constant dense<0.000000e+00> : vector<72xf32>
    %40 = vector.multi_reduction <add>, %39, %cst_25 [1] : vector<72x128xf32> to vector<72xf32>
    %41 = vector.shape_cast %40 : vector<72xf32> to vector<72x1xf32>
    %c0_26 = arith.constant 0 : index
    %c0_27 = arith.constant 0 : index
    %42 = vector.load %arg13[%c0_26, %c0_27] : memref<1x1xf32, #tpu.memory_space<vmem>>, vector<1x1xf32>
    %43 = vector.broadcast %42 : vector<1x1xf32> to vector<72x1xf32>
    %44 = arith.addf %41, %43 : vector<72x1xf32>
    %cst_28 = arith.constant 1.000000e+00 : f32
    %45 = vector.broadcast %cst_28 : f32 to vector<72x8xf32>
    %46 = arith.subf %16, %45 : vector<72x8xf32>
    %cst_29 = arith.constant 1.000000e+30 : f32
    %47 = vector.broadcast %cst_29 : f32 to vector<72x8xf32>
    %48 = arith.mulf %46, %47 : vector<72x8xf32>
    %49 = vector.broadcast %44 : vector<72x1xf32> to vector<72x8xf32>
    %50 = arith.addf %49, %48 : vector<72x8xf32>
    %cst_30 = arith.constant dense<0xFF800000> : vector<8xf32>
    %51 = vector.multi_reduction <maximumf>, %50, %cst_30 [0] : vector<72x8xf32> to vector<8xf32>
    %52 = vector.shape_cast %51 : vector<8xf32> to vector<1x8xf32>
    %53 = vector.broadcast %52 : vector<1x8xf32> to vector<72x8xf32>
    %54 = arith.mulf %16, %53 : vector<72x8xf32>
    %cst_31 = arith.constant dense<0.000000e+00> : vector<72xf32>
    %55 = vector.multi_reduction <add>, %54, %cst_31 [1] : vector<72x8xf32> to vector<72xf32>
    %56 = vector.shape_cast %55 : vector<72xf32> to vector<72x1xf32>
    %57 = arith.subf %44, %56 : vector<72x1xf32>
    %58 = math.exp %57 : vector<72x1xf32>
    %c0_32 = arith.constant 0 : index
    %c0_33 = arith.constant 0 : index
    %59 = vector.load %arg5[%c0_32, %c0_33] : memref<8x72xf32, #tpu.memory_space<vmem>>, vector<8x72xf32>
    %cst_34 = arith.constant dense<0.000000e+00> : vector<8x1xf32>
    %60 = tpu.matmul %59, %58, %cst_34 {dimension_numbers = #tpu.dot_dimension_numbers<[1], [0], [0], [1], [0, 0, 1, 1], [], []>} : vector<8x72xf32>, vector<72x1xf32>, vector<8x1xf32> -> vector<8x1xf32>
    %c0_35 = arith.constant 0 : index
    %c0_36 = arith.constant 0 : index
    %61 = vector.load %arg6[%c0_35, %c0_36] : memref<8x72xf32, #tpu.memory_space<vmem>>, vector<8x72xf32>
    %cst_37 = arith.constant dense<0.000000e+00> : vector<8x1xf32>
    %62 = tpu.matmul %61, %58, %cst_37 {dimension_numbers = #tpu.dot_dimension_numbers<[1], [0], [0], [1], [0, 0, 1, 1], [], []>} : vector<8x72xf32>, vector<72x1xf32>, vector<8x1xf32> -> vector<8x1xf32>
    %cst_38 = arith.constant 8.000000e+00 : f32
    %63 = vector.broadcast %cst_38 : f32 to vector<8x1xf32>
    %64 = arith.mulf %60, %63 : vector<8x1xf32>
    %65 = arith.divf %64, %62 : vector<8x1xf32>
    %c0_39 = arith.constant 0 : index
    %c0_40 = arith.constant 0 : index
    %66 = vector.load %arg14[%c0_39, %c0_40] : memref<8x1xf32, #tpu.memory_space<vmem>>, vector<8x1xf32>
    tpu.vector_store %arg14[%c0_39, %c0_40], %65 {strides = array<i32>} : memref<8x1xf32, #tpu.memory_space<vmem>>, vector<8x1xf32>,
    return
  }
  func.func @transform_0(%arg0: i32) -> (i32, i32) {
    %c0_i32 = arith.constant 0 : i32
    %c0_i32_0 = arith.constant 0 : i32
    return %arg0, %c0_i32 : i32, i32
  }
  func.func @transform_1(%arg0: i32) -> (i32, i32) {
    %c0_i32 = arith.constant 0 : i32
    %c0_i32_0 = arith.constant 0 : i32
    return %arg0, %c0_i32 : i32, i32
  }
  func.func @transform_2(%arg0: i32) -> (i32, i32) {
    %c0_i32 = arith.constant 0 : i32
    %c0_i32_0 = arith.constant 0 : i32
    return %arg0, %c0_i32 : i32, i32
  }
  func.func @transform_3(%arg0: i32) -> (i32, i32) {
    %c0_i32 = arith.constant 0 : i32
    %c0_i32_0 = arith.constant 0 : i32
    %c0_i32_1 = arith.constant 0 : i32
    return %c0_i32, %c0_i32_0 : i32, i32
  }
  func.func @transform_4(%arg0: i32) -> (i32, i32) {
    %c0_i32 = arith.constant 0 : i32
    %c0_i32_0 = arith.constant 0 : i32
    %c0_i32_1 = arith.constant 0 : i32
    return %c0_i32, %c0_i32_0 : i32, i32
  }
  func.func @transform_5(%arg0: i32) -> (i32, i32) {
    %c0_i32 = arith.constant 0 : i32
    %c0_i32_0 = arith.constant 0 : i32
    %c0_i32_1 = arith.constant 0 : i32
    return %c0_i32, %c0_i32_0 : i32, i32
  }
  func.func @transform_6(%arg0: i32) -> (i32, i32) {
    %c0_i32 = arith.constant 0 : i32
    %c0_i32_0 = arith.constant 0 : i32
    %c0_i32_1 = arith.constant 0 : i32
    return %c0_i32, %c0_i32_0 : i32, i32
  }
  func.func @transform_7(%arg0: i32) -> (i32, i32) {
    %c0_i32 = arith.constant 0 : i32
    %c0_i32_0 = arith.constant 0 : i32
    %c0_i32_1 = arith.constant 0 : i32
    return %c0_i32, %c0_i32_0 : i32, i32
  }
  func.func @transform_8(%arg0: i32) -> (i32, i32) {
    %c0_i32 = arith.constant 0 : i32
    %c0_i32_0 = arith.constant 0 : i32
    %c0_i32_1 = arith.constant 0 : i32
    return %c0_i32, %c0_i32_0 : i32, i32
  }
  func.func @transform_9(%arg0: i32) -> (i32, i32) {
    %c0_i32 = arith.constant 0 : i32
    %c0_i32_0 = arith.constant 0 : i32
    %c0_i32_1 = arith.constant 0 : i32
    return %c0_i32, %c0_i32_0 : i32, i32
  }
  func.func @transform_10(%arg0: i32) -> (i32, i32) {
    %c0_i32 = arith.constant 0 : i32
    %c0_i32_0 = arith.constant 0 : i32
    %c0_i32_1 = arith.constant 0 : i32
    return %c0_i32, %c0_i32_0 : i32, i32
  }
  func.func @transform_11(%arg0: i32) -> (i32, i32) {
    %c0_i32 = arith.constant 0 : i32
    %c0_i32_0 = arith.constant 0 : i32
    %c0_i32_1 = arith.constant 0 : i32
    return %c0_i32, %c0_i32_0 : i32, i32
  }
  func.func @transform_12(%arg0: i32) -> (i32, i32) {
    %c0_i32 = arith.constant 0 : i32
    %c0_i32_0 = arith.constant 0 : i32
    %c0_i32_1 = arith.constant 0 : i32
    return %c0_i32, %c0_i32_0 : i32, i32
  }
  func.func @transform_13(%arg0: i32) -> (i32, i32) {
    %c0_i32 = arith.constant 0 : i32
    %c0_i32_0 = arith.constant 0 : i32
    return %arg0, %c0_i32 : i32, i32
  }
}

</mosaic_0001>

<llo_original>
// kernel: tpu_custom_call.1
$region0: #{tpu_custom_call.1}
  #allocation0 [shape = 'u32[]', space=smem, size = 0x4, offset = 0x4, fixed_abs, tag = 'smem constant byte address 0x4 - core index']
  #allocation1 [shape = 'u32[144,128]{1,0:T(1,128)}', space=vmem, size = 0x12000, scoped, tag = 'internal scratch']
  #allocation2 [shape = 'f32[1,1]{1,0:T(1,128)S(1)}', space=vmem, size = 0x200, scoped, tag = 'scoped memory for tpu_custom_call.1']
  %s0 = inlined_call_operand.vmem [shape: f32[16,64], index: 0, kind: input, shape index: {}]
  %s1 = inlined_call_operand.vmem [shape: f32[16,64], index: 1, kind: input, shape index: {}]
  %s2 = inlined_call_operand.vmem [shape: f32[144,1], index: 2, kind: input, shape index: {}]
  %s3 = inlined_call_operand.vmem [shape: f32[72,8], index: 3, kind: input, shape index: {}]
  %s4 = inlined_call_operand.vmem [shape: f32[8,72], index: 4, kind: input, shape index: {}]
  %s5 = inlined_call_operand.vmem [shape: f32[8,72], index: 5, kind: input, shape index: {}]
  %s6 = inlined_call_operand.vmem [shape: bf16[64,128], index: 6, kind: input, shape index: {}]
  %s7 = inlined_call_operand.vmem [shape: f32[1,128], index: 7, kind: input, shape index: {}]
  %s8 = inlined_call_operand.vmem [shape: f32[1,128], index: 8, kind: input, shape index: {}]
  %s9 = inlined_call_operand.vmem [shape: bf16[128,128], index: 9, kind: input, shape index: {}]
  %s10 = inlined_call_operand.vmem [shape: f32[1,128], index: 10, kind: input, shape index: {}]
  %s11 = inlined_call_operand.vmem [shape: f32[1,128], index: 11, kind: input, shape index: {}]
  %s12 = inlined_call_operand.<no memory space> [shape: f32[1,1], index: 12, kind: input, shape index: {}]
  %s13 = inlined_call_operand.vmem [shape: f32[16,1], index: 13, kind: output, shape index: {}]
  %s14 = sld [smem:[#allocation0]]
  $region85: #{tpu_custom_call.1} parent=0
    _
  %s16 = ssub.s32 1, %s14
  %s17 = scalar_select 0, %s16, %s14
  %v18 = vstv %s12
  %19 = vst [vmem:[#allocation2] sm:$0x1] %v18
  loop: start=0, step=1, limit=4
  $region2: #{tpu_custom_call.1} parent=0 // loop_pre_header
    _
  $region3: #{tpu_custom_call.1} parent=0 // loop_header
    %s21 = sphi 0, %s25
    %p22 = scmp.ge.s32.totalorder %s21, 4
    %s31 = sphi 0, %s33
    %s34 = sphi 0, %s31
    %s35 = sphi 0, %s34
    %s51 = sphi 0, %s35
    %s57 = sphi 0, %s59
    %s60 = sphi 0, %s57
    %s61 = sphi 0, %s60
    %s77 = sphi 0, %s61
    %s83 = sphi 0, %s85
    %s86 = sphi 0, %s83
    %s87 = sphi 0, %s86
    %s103 = sphi 0, %s87
    %s107 = sphi 0, %s107
    %s109 = sphi 0, %s107
    %s110 = sphi 0, %s109
    %s124 = sphi 0, %s110
    %s128 = sphi 0, %s128
    %s130 = sphi 0, %s128
    %s131 = sphi 0, %s130
    %s145 = sphi 0, %s131
    %s149 = sphi 0, %s149
    %s151 = sphi 0, %s149
    %s152 = sphi 0, %s151
    %s166 = sphi 0, %s152
    %s170 = sphi 0, %s170
    %s172 = sphi 0, %s170
    %s173 = sphi 0, %s172
    %s187 = sphi 0, %s173
    %s191 = sphi 0, %s191
    %s193 = sphi 0, %s191
    %s194 = sphi 0, %s193
    %s208 = sphi 0, %s194
    %s212 = sphi 0, %s212
    %s214 = sphi 0, %s212
    %s215 = sphi 0, %s214
    %s229 = sphi 0, %s215
    %s233 = sphi 0, %s233
    %s235 = sphi 0, %s233
    %s236 = sphi 0, %s235
    %s250 = sphi 0, %s236
    %s254 = sphi 0, %s254
    %s256 = sphi 0, %s254
    %s257 = sphi 0, %s256
    %s271 = sphi 0, %s257
    %s275 = sphi 0, %s275
    %s277 = sphi 0, %s275
    %s278 = sphi 0, %s277
    %s292 = sphi 0, %s278
    %s296 = sphi 0, %s296
    %s298 = sphi 0, %s296
    %s299 = sphi 0, %s298
    %s313 = sphi 0, %s299
    %s319 = sphi 0, %s321
    %s322 = sphi 0, %s319
    %s323 = sphi 0, %s322
    %s339 = sphi 0, %s323
  $region4: #{tpu_custom_call.1} parent=0 // loop_header_branch
    %24 = sbr.rel (%p22) target = $region8
  $region5: #{tpu_custom_call.1} parent=0 // loop_body
    %s26 = ssub.s32 %s21, 1
    %s27 = ssub.s32 %s21, 2
    %s28 = sadd.s32 %s21, 1
    %s29 = ssub.s32 %s21, %s28
    %p30 = scmp.eq.s32.totalorder %s29, 0
    %s32 = sadd.s32 %s31, 1
    %s33 = scalar_select %p30, %s31, %s32
    %p36 = pneg %p30
    %p37 = scmp.eq.s32.totalorder %s21, 1
    %p38 = por %p36, %p37
    %p39 = scmp.ne.s32.totalorder %s31, %s34
    %p40 = scmp.eq.s32.totalorder %s21, 0
    %p41 = por %p39, %p40
    %p42 = scmp.ne.s32.totalorder %s31, %s34
    %p43 = scmp.eq.s32.totalorder %s26, 1
    %p44 = por %p42, %p43
    %p45 = scmp.ne.s32.totalorder %s34, %s35
    %p46 = scmp.eq.s32.totalorder %s26, 0
    %p47 = por %p45, %p46
    %p48 = scmp.ne.s32.totalorder %s34, %s35
    %p49 = scmp.eq.s32.totalorder %s27, 1
    %p50 = por %p48, %p49
    %p52 = scmp.ne.s32.totalorder %s35, %s51
    %p53 = scmp.eq.s32.totalorder %s27, 0
    %p54 = por %p52, %p53
    %s55 = ssub.s32 %s21, %s28
    %p56 = scmp.eq.s32.totalorder %s55, 0
    %s58 = sadd.s32 %s57, 1
    %s59 = scalar_select %p56, %s57, %s58
    %p62 = pneg %p56
    %p63 = scmp.eq.s32.totalorder %s21, 1
    %p64 = por %p62, %p63
    %p65 = scmp.ne.s32.totalorder %s57, %s60
    %p66 = scmp.eq.s32.totalorder %s21, 0
    %p67 = por %p65, %p66
    %p68 = scmp.ne.s32.totalorder %s57, %s60
    %p69 = scmp.eq.s32.totalorder %s26, 1
    %p70 = por %p68, %p69
    %p71 = scmp.ne.s32.totalorder %s60, %s61
    %p72 = scmp.eq.s32.totalorder %s26, 0
    %p73 = por %p71, %p72
    %p74 = scmp.ne.s32.totalorder %s60, %s61
    %p75 = scmp.eq.s32.totalorder %s27, 1
    %p76 = por %p74, %p75
    %p78 = scmp.ne.s32.totalorder %s61, %s77
    %p79 = scmp.eq.s32.totalorder %s27, 0
    %p80 = por %p78, %p79
    %s81 = ssub.s32 %s21, %s28
    %p82 = scmp.eq.s32.totalorder %s81, 0
    %s84 = sadd.s32 %s83, 1
    %s85 = scalar_select %p82, %s83, %s84
    %p88 = pneg %p82
    %p89 = scmp.eq.s32.totalorder %s21, 1
    %p90 = por %p88, %p89
    %p91 = scmp.ne.s32.totalorder %s83, %s86
    %p92 = scmp.eq.s32.totalorder %s21, 0
    %p93 = por %p91, %p92
    %p94 = scmp.ne.s32.totalorder %s83, %s86
    %p95 = scmp.eq.s32.totalorder %s26, 1
    %p96 = por %p94, %p95
    %p97 = scmp.ne.s32.totalorder %s86, %s87
    %p98 = scmp.eq.s32.totalorder %s26, 0
    %p99 = por %p97, %p98
    %p100 = scmp.ne.s32.totalorder %s86, %s87
    %p101 = scmp.eq.s32.totalorder %s27, 1
    %p102 = por %p100, %p101
    %p104 = scmp.ne.s32.totalorder %s87, %s103
    %p105 = scmp.eq.s32.totalorder %s27, 0
    %p106 = por %p104, %p105
    %s108 = sadd.s32 %s107, 1
    %p111 = scmp.eq.s32.totalorder %s21, 1
    %p112 = scmp.ne.s32.totalorder %s107, %s109
    %p113 = scmp.eq.s32.totalorder %s21, 0
    %p114 = por %p112, %p113
    %p115 = scmp.ne.s32.totalorder %s107, %s109
    %p116 = scmp.eq.s32.totalorder %s26, 1
    %p117 = por %p115, %p116
    %p118 = scmp.ne.s32.totalorder %s109, %s110
    %p119 = scmp.eq.s32.totalorder %s26, 0
    %p120 = por %p118, %p119
    %p121 = scmp.ne.s32.totalorder %s109, %s110
    %p122 = scmp.eq.s32.totalorder %s27, 1
    %p123 = por %p121, %p122
    %p125 = scmp.ne.s32.totalorder %s110, %s124
    %p126 = scmp.eq.s32.totalorder %s27, 0
    %p127 = por %p125, %p126
    %s129 = sadd.s32 %s128, 1
    %p132 = scmp.eq.s32.totalorder %s21, 1
    %p133 = scmp.ne.s32.totalorder %s128, %s130
    %p134 = scmp.eq.s32.totalorder %s21, 0
    %p135 = por %p133, %p134
    %p136 = scmp.ne.s32.totalorder %s128, %s130
    %p137 = scmp.eq.s32.totalorder %s26, 1
    %p138 = por %p136, %p137
    %p139 = scmp.ne.s32.totalorder %s130, %s131
    %p140 = scmp.eq.s32.totalorder %s26, 0
    %p141 = por %p139, %p140
    %p142 = scmp.ne.s32.totalorder %s130, %s131
    %p143 = scmp.eq.s32.totalorder %s27, 1
    %p144 = por %p142, %p143
    %p146 = scmp.ne.s32.totalorder %s131, %s145
    %p147 = scmp.eq.s32.totalorder %s27, 0
    %p148 = por %p146, %p147
    %s150 = sadd.s32 %s149, 1
    %p153 = scmp.eq.s32.totalorder %s21, 1
    %p154 = scmp.ne.s32.totalorder %s149, %s151
    %p155 = scmp.eq.s32.totalorder %s21, 0
    %p156 = por %p154, %p155
    %p157 = scmp.ne.s32.totalorder %s149, %s151
    %p158 = scmp.eq.s32.totalorder %s26, 1
    %p159 = por %p157, %p158
    %p160 = scmp.ne.s32.totalorder %s151, %s152
    %p161 = scmp.eq.s32.totalorder %s26, 0
    %p162 = por %p160, %p161
    %p163 = scmp.ne.s32.totalorder %s151, %s152
    %p164 = scmp.eq.s32.totalorder %s27, 1
    %p165 = por %p163, %p164
    %p167 = scmp.ne.s32.totalorder %s152, %s166
    %p168 = scmp.eq.s32.totalorder %s27, 0
    %p169 = por %p167, %p168
    %s171 = sadd.s32 %s170, 1
    %p174 = scmp.eq.s32.totalorder %s21, 1
    %p175 = scmp.ne.s32.totalorder %s170, %s172
    %p176 = scmp.eq.s32.totalorder %s21, 0
    %p177 = por %p175, %p176
    %p178 = scmp.ne.s32.totalorder %s170, %s172
    %p179 = scmp.eq.s32.totalorder %s26, 1
    %p180 = por %p178, %p179
    %p181 = scmp.ne.s32.totalorder %s172, %s173
    %p182 = scmp.eq.s32.totalorder %s26, 0
    %p183 = por %p181, %p182
    %p184 = scmp.ne.s32.totalorder %s172, %s173
    %p185 = scmp.eq.s32.totalorder %s27, 1
    %p186 = por %p184, %p185
    %p188 = scmp.ne.s32.totalorder %s173, %s187
    %p189 = scmp.eq.s32.totalorder %s27, 0
    %p190 = por %p188, %p189
    %s192 = sadd.s32 %s191, 1
    %p195 = scmp.eq.s32.totalorder %s21, 1
    %p196 = scmp.ne.s32.totalorder %s191, %s193
    %p197 = scmp.eq.s32.totalorder %s21, 0
    %p198 = por %p196, %p197
    %p199 = scmp.ne.s32.totalorder %s191, %s193
    %p200 = scmp.eq.s32.totalorder %s26, 1
    %p201 = por %p199, %p200
    %p202 = scmp.ne.s32.totalorder %s193, %s194
    %p203 = scmp.eq.s32.totalorder %s26, 0
    %p204 = por %p202, %p203
    %p205 = scmp.ne.s32.totalorder %s193, %s194
    %p206 = scmp.eq.s32.totalorder %s27, 1
    %p207 = por %p205, %p206
    %p209 = scmp.ne.s32.totalorder %s194, %s208
    %p210 = scmp.eq.s32.totalorder %s27, 0
    %p211 = por %p209, %p210
    %s213 = sadd.s32 %s212, 1
    %p216 = scmp.eq.s32.totalorder %s21, 1
    %p217 = scmp.ne.s32.totalorder %s212, %s214
    %p218 = scmp.eq.s32.totalorder %s21, 0
    %p219 = por %p217, %p218
    %p220 = scmp.ne.s32.totalorder %s212, %s214
    %p221 = scmp.eq.s32.totalorder %s26, 1
    %p222 = por %p220, %p221
    %p223 = scmp.ne.s32.totalorder %s214, %s215
    %p224 = scmp.eq.s32.totalorder %s26, 0
    %p225 = por %p223, %p224
    %p226 = scmp.ne.s32.totalorder %s214, %s215
    %p227 = scmp.eq.s32.totalorder %s27, 1
    %p228 = por %p226, %p227
    %p230 = scmp.ne.s32.totalorder %s215, %s229
    %p231 = scmp.eq.s32.totalorder %s27, 0
    %p232 = por %p230, %p231
    %s234 = sadd.s32 %s233, 1
    %p237 = scmp.eq.s32.totalorder %s21, 1
    %p238 = scmp.ne.s32.totalorder %s233, %s235
    %p239 = scmp.eq.s32.totalorder %s21, 0
    %p240 = por %p238, %p239
    %p241 = scmp.ne.s32.totalorder %s233, %s235
    %p242 = scmp.eq.s32.totalorder %s26, 1
    %p243 = por %p241, %p242
    %p244 = scmp.ne.s32.totalorder %s235, %s236
    %p245 = scmp.eq.s32.totalorder %s26, 0
    %p246 = por %p244, %p245
    %p247 = scmp.ne.s32.totalorder %s235, %s236
    %p248 = scmp.eq.s32.totalorder %s27, 1
    %p249 = por %p247, %p248
    %p251 = scmp.ne.s32.totalorder %s236, %s250
    %p252 = scmp.eq.s32.totalorder %s27, 0
    %p253 = por %p251, %p252
    %s255 = sadd.s32 %s254, 1
    %p258 = scmp.eq.s32.totalorder %s21, 1
    %p259 = scmp.ne.s32.totalorder %s254, %s256
    %p260 = scmp.eq.s32.totalorder %s21, 0
    %p261 = por %p259, %p260
    %p262 = scmp.ne.s32.totalorder %s254, %s256
    %p263 = scmp.eq.s32.totalorder %s26, 1
    %p264 = por %p262, %p263
    %p265 = scmp.ne.s32.totalorder %s256, %s257
    %p266 = scmp.eq.s32.totalorder %s26, 0
    %p267 = por %p265, %p266
    %p268 = scmp.ne.s32.totalorder %s256, %s257
    %p269 = scmp.eq.s32.totalorder %s27, 1
    %p270 = por %p268, %p269
    %p272 = scmp.ne.s32.totalorder %s257, %s271
    %p273 = scmp.eq.s32.totalorder %s27, 0
    %p274 = por %p272, %p273
    %s276 = sadd.s32 %s275, 1
    %p279 = scmp.eq.s32.totalorder %s21, 1
    %p280 = scmp.ne.s32.totalorder %s275, %s277
    %p281 = scmp.eq.s32.totalorder %s21, 0
    %p282 = por %p280, %p281
    %p283 = scmp.ne.s32.totalorder %s275, %s277
    %p284 = scmp.eq.s32.totalorder %s26, 1
    %p285 = por %p283, %p284
    %p286 = scmp.ne.s32.totalorder %s277, %s278
    %p287 = scmp.eq.s32.totalorder %s26, 0
    %p288 = por %p286, %p287
    %p289 = scmp.ne.s32.totalorder %s277, %s278
    %p290 = scmp.eq.s32.totalorder %s27, 1
    %p291 = por %p289, %p290
    %p293 = scmp.ne.s32.totalorder %s278, %s292
    %p294 = scmp.eq.s32.totalorder %s27, 0
    %p295 = por %p293, %p294
    %s297 = sadd.s32 %s296, 1
    %p300 = scmp.eq.s32.totalorder %s21, 1
    %p301 = scmp.ne.s32.totalorder %s296, %s298
    %p302 = scmp.eq.s32.totalorder %s21, 0
    %p303 = por %p301, %p302
    %p304 = scmp.ne.s32.totalorder %s296, %s298
    %p305 = scmp.eq.s32.totalorder %s26, 1
    %p306 = por %p304, %p305
    %p307 = scmp.ne.s32.totalorder %s298, %s299
    %p308 = scmp.eq.s32.totalorder %s26, 0
    %p309 = por %p307, %p308
    %p310 = scmp.ne.s32.totalorder %s298, %s299
    %p311 = scmp.eq.s32.totalorder %s27, 1
    %p312 = por %p310, %p311
    %p314 = scmp.ne.s32.totalorder %s299, %s313
    %p315 = scmp.eq.s32.totalorder %s27, 0
    %p316 = por %p314, %p315
    %s317 = ssub.s32 %s21, %s28
    %p318 = scmp.eq.s32.totalorder %s317, 0
    %s320 = sadd.s32 %s319, 1
    %s321 = scalar_select %p318, %s319, %s320
    %p324 = pneg %p318
    %p325 = scmp.eq.s32.totalorder %s21, 1
    %p326 = por %p324, %p325
    %p327 = scmp.ne.s32.totalorder %s319, %s322
    %p328 = scmp.eq.s32.totalorder %s21, 0
    %p329 = por %p327, %p328
    %p330 = scmp.ne.s32.totalorder %s319, %s322
    %p331 = scmp.eq.s32.totalorder %s26, 1
    %p332 = por %p330, %p331
    %p333 = scmp.ne.s32.totalorder %s322, %s323
    %p334 = scmp.eq.s32.totalorder %s26, 0
    %p335 = por %p333, %p334
    %p336 = scmp.ne.s32.totalorder %s322, %s323
    %p337 = scmp.eq.s32.totalorder %s27, 1
    %p338 = por %p336, %p337
    %p340 = scmp.ne.s32.totalorder %s323, %s339
    %p341 = scmp.eq.s32.totalorder %s27, 0
    %p342 = por %p340, %p341
    %p343 = scmp.le.s32.totalorder 1, %s21
    %p344 = scmp.lt.s32.totalorder %s21, 3
    %p345 = pnand %p343, %p344
    %p346 = pneg %p345
    // Predicated region
    $region9: #{tpu_custom_call.1} parent=5 // pred_check
      _
    $region10: #{tpu_custom_call.1} parent=5 // pred_check_branch
      %348 = sbr.rel (%p345) target = $region12
    $region11: #{tpu_custom_call.1} parent=5 // pred_region
      %s349 = ssub.s32 %s21, 1
      // Predicated region
      $region13: #{tpu_custom_call.1} parent=11 // pred_check
        %p350 = pneg %p120
      $region14: #{tpu_custom_call.1} parent=11 // pred_check_branch
        %352 = sbr.rel (%p350) target = $region16
      $region15: #{tpu_custom_call.1} parent=11 // pred_region
        _
      $region16: #{tpu_custom_call.1} parent=11 // pred_fallthru
        _
      // Predicated region
      $region17: #{tpu_custom_call.1} parent=11 // pred_check
        %p353 = pneg %p141
      $region18: #{tpu_custom_call.1} parent=11 // pred_check_branch
        %355 = sbr.rel (%p353) target = $region20
      $region19: #{tpu_custom_call.1} parent=11 // pred_region
        _
      $region20: #{tpu_custom_call.1} parent=11 // pred_fallthru
        _
      // Predicated region
      $region21: #{tpu_custom_call.1} parent=11 // pred_check
        %p356 = pneg %p162
      $region22: #{tpu_custom_call.1} parent=11 // pred_check_branch
        %358 = sbr.rel (%p356) target = $region24
      $region23: #{tpu_custom_call.1} parent=11 // pred_region
        _
      $region24: #{tpu_custom_call.1} parent=11 // pred_fallthru
        _
      // Predicated region
      $region25: #{tpu_custom_call.1} parent=11 // pred_check
        %p359 = pneg %p183
      $region26: #{tpu_custom_call.1} parent=11 // pred_check_branch
        %361 = sbr.rel (%p359) target = $region28
      $region27: #{tpu_custom_call.1} parent=11 // pred_region
        _
      $region28: #{tpu_custom_call.1} parent=11 // pred_fallthru
        _
      // Predicated region
      $region29: #{tpu_custom_call.1} parent=11 // pred_check
        %p362 = pneg %p204
      $region30: #{tpu_custom_call.1} parent=11 // pred_check_branch
        %364 = sbr.rel (%p362) target = $region32
      $region31: #{tpu_custom_call.1} parent=11 // pred_region
        _
      $region32: #{tpu_custom_call.1} parent=11 // pred_fallthru
        _
      // Predicated region
      $region33: #{tpu_custom_call.1} parent=11 // pred_check
        %p365 = pneg %p225
      $region34: #{tpu_custom_call.1} parent=11 // pred_check_branch
        %367 = sbr.rel (%p365) target = $region36
      $region35: #{tpu_custom_call.1} parent=11 // pred_region
        _
      $region36: #{tpu_custom_call.1} parent=11 // pred_fallthru
        _
      // Predicated region
      $region37: #{tpu_custom_call.1} parent=11 // pred_check
        %p368 = pneg %p246
      $region38: #{tpu_custom_call.1} parent=11 // pred_check_branch
        %370 = sbr.rel (%p368) target = $region40
      $region39: #{tpu_custom_call.1} parent=11 // pred_region
        _
      $region40: #{tpu_custom_call.1} parent=11 // pred_fallthru
        _
      // Predicated region
      $region41: #{tpu_custom_call.1} parent=11 // pred_check
        %p371 = pneg %p267
      $region42: #{tpu_custom_call.1} parent=11 // pred_check_branch
        %373 = sbr.rel (%p371) target = $region44
      $region43: #{tpu_custom_call.1} parent=11 // pred_region
        _
      $region44: #{tpu_custom_call.1} parent=11 // pred_fallthru
        _
      // Predicated region
      $region45: #{tpu_custom_call.1} parent=11 // pred_check
        %p374 = pneg %p288
      $region46: #{tpu_custom_call.1} parent=11 // pred_check_branch
        %376 = sbr.rel (%p374) target = $region48
      $region47: #{tpu_custom_call.1} parent=11 // pred_region
        _
      $region48: #{tpu_custom_call.1} parent=11 // pred_fallthru
        _
      // Predicated region
      $region49: #{tpu_custom_call.1} parent=11 // pred_check
        %p377 = pneg %p309
      $region50: #{tpu_custom_call.1} parent=11 // pred_check_branch
        %379 = sbr.rel (%p377) target = $region52
      $region51: #{tpu_custom_call.1} parent=11 // pred_region
        _
      $region52: #{tpu_custom_call.1} parent=11 // pred_fallthru
        _
    $region12: #{tpu_custom_call.1} parent=5 // pred_fallthru
      _
    %p380 = scmp.lt.s32.totalorder %s21, 2
    // Predicated region
    $region53: #{tpu_custom_call.1} parent=5 // pred_check
      %p381 = pneg %p380
    $region54: #{tpu_custom_call.1} parent=5 // pred_check_branch
      %383 = sbr.rel (%p381) target = $region56
    $region55: #{tpu_custom_call.1} parent=5 // pred_region
      // Predicated region
      $region57: #{tpu_custom_call.1} parent=55 // pred_check
        %p384 = pneg %p41
      $region58: #{tpu_custom_call.1} parent=55 // pred_check_branch
        %386 = sbr.rel (%p384) target = $region60
      $region59: #{tpu_custom_call.1} parent=55 // pred_region
        %p387 = scmp.lt.s32.totalorder %s21, 1
        %s388 = scalar_select %p387, %s21, 1
        %s389 = smul.addr %s388, 8
        %s390 = scalar_lea.vmem %s0, %s389
      $region60: #{tpu_custom_call.1} parent=55 // pred_fallthru
        _
      // Predicated region
      $region61: #{tpu_custom_call.1} parent=55 // pred_check
        %p391 = pneg %p67
      $region62: #{tpu_custom_call.1} parent=55 // pred_check_branch
        %393 = sbr.rel (%p391) target = $region64
      $region63: #{tpu_custom_call.1} parent=55 // pred_region
        %p394 = scmp.lt.s32.totalorder %s21, 1
        %s395 = scalar_select %p394, %s21, 1
        %s396 = smul.addr %s395, 8
        %s397 = scalar_lea.vmem %s1, %s396
      $region64: #{tpu_custom_call.1} parent=55 // pred_fallthru
        _
      // Predicated region
      $region65: #{tpu_custom_call.1} parent=55 // pred_check
        %p398 = pneg %p93
      $region66: #{tpu_custom_call.1} parent=55 // pred_check_branch
        %400 = sbr.rel (%p398) target = $region68
      $region67: #{tpu_custom_call.1} parent=55 // pred_region
        %s401 = smul.u32 9, %s21
        %p402 = scmp.lt.s32.totalorder %s401, 17
        %s403 = scalar_select %p402, %s401, 17
        %s404 = smul.addr %s403, 8
        %s405 = scalar_lea.vmem %s2, %s404
        %s406 = smul.u32 9, %s21
      $region68: #{tpu_custom_call.1} parent=55 // pred_fallthru
        _
    $region56: #{tpu_custom_call.1} parent=5 // pred_fallthru
      _
    %p407 = scmp.le.s32.totalorder 1, %s21
    %p408 = scmp.lt.s32.totalorder %s21, 3
    %p409 = pnand %p407, %p408
    %p410 = pneg %p409
    // Predicated region
    $region69: #{tpu_custom_call.1} parent=5 // pred_check
      _
    $region70: #{tpu_custom_call.1} parent=5 // pred_check_branch
      %412 = sbr.rel (%p409) target = $region72
    $region71: #{tpu_custom_call.1} parent=5 // pred_region
      %s413 = ssub.s32 %s21, 1
      %p414 = scmp.lt.s32.totalorder %s26, 1
      %s415 = scalar_select %p414, %s26, 1
      %s416 = smul.addr %s415, 8
      %s417 = scalar_lea.vmem %s0, %s416
      %p418 = pneg %p47
      %p419 = pneg %p44
      %p420 = scmp.lt.s32.totalorder %s26, 1
      %s421 = scalar_select %p420, %s26, 1
      %s422 = smul.addr %s421, 8
      %s423 = scalar_lea.vmem %s1, %s422
      %p424 = pneg %p73
      %p425 = pneg %p70
      %s426 = smul.u32 9, %s26
      %p427 = scmp.lt.s32.totalorder %s426, 17
      %s428 = scalar_select %p427, %s426, 17
      %s429 = smul.addr %s428, 8
      %s430 = scalar_lea.vmem %s2, %s429
      %p431 = pneg %p99
      %p432 = pneg %p96
      %p433 = pneg %p120
      %p434 = pneg %p117
      %p435 = pneg %p141
      %p436 = pneg %p138
      %p437 = pneg %p162
      %p438 = pneg %p159
      %p439 = pneg %p183
      %p440 = pneg %p180
      %p441 = pneg %p204
      %p442 = pneg %p201
      %p443 = pneg %p225
      %p444 = pneg %p222
      %p445 = pneg %p246
      %p446 = pneg %p243
      %p447 = pneg %p267
      %p448 = pneg %p264
      %p449 = pneg %p288
      %p450 = pneg %p285
      %p451 = pneg %p309
      %p452 = pneg %p306
      %p453 = pneg %p335
      %p454 = pneg %p332
      %p455 = scmp.lt.s32.totalorder %s26, 1
      %s456 = scalar_select %p455, %s26, 1
      %s457 = smul.addr %s456, 8
      %s458 = scalar_lea.vmem %s13, %s457
      %p459 = scmp.lt.s32.totalorder %s26, 1
      %s460 = scalar_select %p459, %s26, 1
      %s461 = smul.addr %s460, 8
      %s462 = scalar_lea.vmem %s0, %s461
      %p463 = scmp.lt.s32.totalorder %s26, 1
      %s464 = scalar_select %p463, %s26, 1
      %s465 = smul.addr %s464, 8
      %s466 = scalar_lea.vmem %s1, %s465
      %s467 = smul.u32 9, %s26
      %p468 = scmp.lt.s32.totalorder %s467, 17
      %s469 = scalar_select %p468, %s467, 17
      %s470 = smul.addr %s469, 8
      %s471 = scalar_lea.vmem %s2, %s470
      %s472 = smul.u32 9, %s26
      %p473 = scmp.lt.s32.totalorder %s26, 1
      %s474 = scalar_select %p473, %s26, 1
      %s475 = smul.addr %s474, 8
      %s476 = scalar_lea.vmem %s13, %s475
      %v478 = vld [vmem:[%s462] sm:$0xff]
      %v479 = vld [vmem:[%s466] sm:$0xff]
      %v480 = vmul.f32 %v478, %v478
      %vm481 = vcmask 523264
      %v482 = vsel %vm481, %v480, 0.0
      %483 = vadd.xlane.f32.xlu0 %v482
      %v484 = vpop.xlane.xlu0 %483
      %v485 = vmul.f32 %v479, %v479
      %v486 = vsel %vm481, %v485, 0.0
      %487 = vadd.xlane.f32.xlu0 %v486
      %v488 = vpop.xlane.xlu0 %487
      %v489 = vmul.f32 %v478, %v479
      %v490 = vmul.f32 %v484, %v488
      %v491 = vrsqrt.pop %v490
      %v492 = vmul.f32 %v489, %v491
      %v493 = vpack.c.bf16 %v492, %v492
      %v494 = vld [vmem:[%s6] sm:$0xf]
      %v495 = vld [vmem:[%s6 + $0x4] sm:$0xf]
      %v496 = vld [vmem:[%s6 + $0x8] sm:$0xf]
      %v497 = vld [vmem:[%s6 + $0xc] sm:$0xf]
      %v498 = vld [vmem:[%s6 + $0x10] sm:$0xf]
      %v499 = vld [vmem:[%s6 + $0x14] sm:$0xf]
      %v500 = vld [vmem:[%s6 + $0x18] sm:$0xf]
      %v501 = vld [vmem:[%s6 + $0x1c] sm:$0xf]
      %v510 = vunpack.c.l.b16 %v494
      %v511 = vunpack.c.l.b16 %v495
      %v512 = vunpack.c.l.b16 %v496
      %v513 = vunpack.c.l.b16 %v497
      %v514 = vunpack.c.l.b16 %v498
      %v515 = vunpack.c.l.b16 %v499
      %v516 = vunpack.c.l.b16 %v500
      %v517 = vunpack.c.l.b16 %v501
      %v518 = vpack.c.b16 %v511, %v510
      %v519 = vpack.c.b16 %v513, %v512
      %v520 = vpack.c.b16 %v515, %v514
      %v521 = vpack.c.b16 %v517, %v516
      %v527 = vsel %vm481, %v493, 0
      %529 = vmatprep.subr.bf16.mxu0 0
      %530 = vmatpush1.bf16.msra.mxu0 0
      %531 = vmatprep.subr.bf16.mxu0 0
      %532 = vmatpush1.bf16.msra.mxu0 0
      %533 = vmatprep.subr.bf16.mxu0 0
      %534 = vmatpush1.bf16.msra.mxu0 0
      %535 = vmatprep.subr.bf16.mxu0 0
      %536 = vmatpush1.bf16.msra.mxu0 0
      %537 = vmatprep.subr.bf16.mxu0 0
      %538 = vmatpush1.bf16.msra.mxu0 %v521
      %539 = vmatprep.subr.bf16.mxu0 0
      %540 = vmatpush1.bf16.msra.mxu0 %v520
      %541 = vmatprep.subr.bf16.mxu0 0
      %542 = vmatpush1.bf16.msra.mxu0 %v519
      %543 = vmatprep.subr.bf16.mxu0 0
      %544 = vmatpush1.bf16.msra.mxu0 %v518
      %545 = vmatprep.subr.bf16.mxu0 0
      %546 = vmatpush2.bf16.msra.mxu0 0
      %547 = vmatprep.subr.bf16.mxu0 0
      %548 = vmatpush2.bf16.msra.mxu0 0
      %549 = vmatprep.subr.bf16.mxu0 0
      %550 = vmatpush2.bf16.msra.mxu0 0
      %551 = vmatprep.subr.bf16.mxu0 0
      %552 = vmatpush2.bf16.msra.mxu0 0
      %553 = vmatprep.subr.bf16.mxu0 0
      %554 = vmatpush2.bf16.msra.mxu0 0
      %555 = vmatprep.subr.bf16.mxu0 0
      %556 = vmatpush2.bf16.msra.mxu0 0
      %557 = vmatprep.subr.bf16.mxu0 0
      %558 = vmatpush2.bf16.msra.mxu0 0
      %559 = vmatprep.subr.bf16.mxu0 0
      %560 = vmatpush2.bf16.msra.mxu0 0
      %561 = vmatprep.mubr.bf16.mxu0 0
      %562 = vmatmul.mubr.bf16.gmra.mxu0 %v527
      %v563 = vpop.f32.mrf.mxu0
      %v564 = vadd.f32 0.0, %v563
      %v565 = vpop.f32.mrf.mxu0
      %v566 = vpop.f32.mrf.mxu0
      %v567 = vpop.f32.mrf.mxu0
      %568 = vdwg.mxu0
      %v569 = vld [vmem:[%s3] sm:$0xff]
      %v570 = vld [vmem:[%s3 + $0x8] sm:$0xff]
      %v571 = vld [vmem:[%s3 + $0x10] sm:$0xff]
      %v572 = vld [vmem:[%s3 + $0x18] sm:$0xff]
      %v573 = vld [vmem:[%s3 + $0x20] sm:$0xff]
      %v574 = vld [vmem:[%s3 + $0x28] sm:$0xff]
      %v575 = vld [vmem:[%s3 + $0x30] sm:$0xff]
      %v576 = vld [vmem:[%s3 + $0x38] sm:$0xff]
      %v577 = vld [vmem:[%s3 + $0x40] sm:$0xff]
      %v578 = vld [vmem:[%s471] sm:$0xff]
      %v579 = vld [vmem:[%s471 + $0x8] sm:$0xff]
      %v580 = vld [vmem:[%s471 + $0x10] sm:$0xff]
      %v581 = vld [vmem:[%s471 + $0x18] sm:$0xff]
      %v582 = vld [vmem:[%s471 + $0x20] sm:$0xff]
      %v583 = vld [vmem:[%s471 + $0x28] sm:$0xff]
      %v584 = vld [vmem:[%s471 + $0x30] sm:$0xff]
      %v585 = vld [vmem:[%s471 + $0x38] sm:$0xff]
      %v586 = vld [vmem:[%s471 + $0x40] sm:$0xff]
      %v587 = vld [vmem:[%s7] sm:$0x1]
      %589 = vset.pattern.permute.xlu0 0
      %590 = vperm.xlu0 %589, %v578
      %v591 = vpop.permute.xlu0 %590
      %594 = vset.pattern.permute.xlu0 0
      %595 = vperm.xlu0 %594, %v579
      %v596 = vpop.permute.xlu0 %595
      %599 = vset.pattern.permute.xlu0 0
      %600 = vperm.xlu0 %599, %v580
      %v601 = vpop.permute.xlu0 %600
      %604 = vset.pattern.permute.xlu0 0
      %605 = vperm.xlu0 %604, %v581
      %v606 = vpop.permute.xlu0 %605
      %609 = vset.pattern.permute.xlu0 0
      %610 = vperm.xlu0 %609, %v582
      %v611 = vpop.permute.xlu0 %610
      %614 = vset.pattern.permute.xlu0 0
      %615 = vperm.xlu0 %614, %v583
      %v616 = vpop.permute.xlu0 %615
      %619 = vset.pattern.permute.xlu0 0
      %620 = vperm.xlu0 %619, %v584
      %v621 = vpop.permute.xlu0 %620
      %624 = vset.pattern.permute.xlu0 0
      %625 = vperm.xlu0 %624, %v585
      %v626 = vpop.permute.xlu0 %625
      %629 = vset.pattern.permute.xlu0 0
      %630 = vperm.xlu0 %629, %v586
      %v631 = vpop.permute.xlu0 %630
      %v634 = vlaneseq
      %v635 = vshrl.u32 %v634, 7
      %v636 = vsub.s32 0, %v635
      %v637 = vrot.slane %v587, %v636
      %v639 = vmul.f32 %v591, %v637
      %v640 = vmul.f32 %v596, %v637
      %v641 = vmul.f32 %v601, %v637
      %v642 = vmul.f32 %v606, %v637
      %v643 = vmul.f32 %v611, %v637
      %v644 = vmul.f32 %v616, %v637
      %v645 = vmul.f32 %v621, %v637
      %v646 = vmul.f32 %v626, %v637
      %v647 = vmul.f32 %v631, %v637
      %vm648 = vcmask 64512
      %v650 = vsel %vm648, %v569, 0
      %v653 = vsel %vm648, %v570, 0
      %v656 = vsel %vm648, %v571, 0
      %v659 = vsel %vm648, %v572, 0
      %v662 = vsel %vm648, %v573, 0
      %v665 = vsel %vm648, %v574, 0
      %v668 = vsel %vm648, %v575, 0
      %v671 = vsel %vm648, %v576, 0
      %v674 = vsel %vm648, %v577, 0
      %676 = vmatprep.subr.mxu0 0.0
      %677 = vmatpush1.msra.mxu0 0.0
      %678 = vmatprep.subr.mxu0 0.0
      %679 = vmatpush1.msra.mxu0 0.0
      %680 = vmatprep.subr.mxu0 0.0
      %681 = vmatpush1.msra.mxu0 0.0
      %682 = vmatprep.subr.mxu0 0.0
      %683 = vmatpush1.msra.mxu0 0.0
      %684 = vmatprep.subr.mxu0 0.0
      %685 = vmatpush1.msra.mxu0 0.0
      %686 = vmatprep.subr.mxu0 0.0
      %687 = vmatpush1.msra.mxu0 0.0
      %688 = vmatprep.subr.mxu0 0.0
      %689 = vmatpush1.msra.mxu0 0.0
      %690 = vmatprep.subr.mxu0 0.0
      %691 = vmatpush1.msra.mxu0 0.0
      %692 = vmatprep.subr.mxu0 0.0
      %693 = vmatpush1.msra.mxu0 0.0
      %694 = vmatprep.subr.mxu0 0.0
      %695 = vmatpush1.msra.mxu0 0.0
      %696 = vmatprep.subr.mxu0 0.0
      %697 = vmatpush1.msra.mxu0 0.0
      %698 = vmatprep.subr.mxu0 0.0
      %699 = vmatpush1.msra.mxu0 0.0
      %700 = vmatprep.subr.mxu0 0.0
      %701 = vmatpush1.msra.mxu0 0.0
      %702 = vmatprep.subr.mxu0 0.0
      %703 = vmatpush1.msra.mxu0 0.0
      %704 = vmatprep.subr.mxu0 0.0
      %705 = vmatpush1.msra.mxu0 0.0
      %706 = vmatprep.subr.mxu0 0.0
      %707 = vmatpush1.msra.mxu0 %v564
      %708 = vmatprep.subr.mxu0 0.0
      %709 = vmatpush2.msra.mxu0 0.0
      %710 = vmatprep.subr.mxu0 0.0
      %711 = vmatpush2.msra.mxu0 0.0
      %712 = vmatprep.subr.mxu0 0.0
      %713 = vmatpush2.msra.mxu0 0.0
      %714 = vmatprep.subr.mxu0 0.0
      %715 = vmatpush2.msra.mxu0 0.0
      %716 = vmatprep.subr.mxu0 0.0
      %717 = vmatpush2.msra.mxu0 0.0
      %718 = vmatprep.subr.mxu0 0.0
      %719 = vmatpush2.msra.mxu0 0.0
      %720 = vmatprep.subr.mxu0 0.0
      %721 = vmatpush2.msra.mxu0 0.0
      %722 = vmatprep.subr.mxu0 0.0
      %723 = vmatpush2.msra.mxu0 0.0
      %724 = vmatprep.subr.mxu0 0.0
      %725 = vmatpush2.msra.mxu0 0.0
      %726 = vmatprep.subr.mxu0 0.0
      %727 = vmatpush2.msra.mxu0 0.0
      %728 = vmatprep.subr.mxu0 0.0
      %729 = vmatpush2.msra.mxu0 0.0
      %730 = vmatprep.subr.mxu0 0.0
      %731 = vmatpush2.msra.mxu0 0.0
      %732 = vmatprep.subr.mxu0 0.0
      %733 = vmatpush2.msra.mxu0 0.0
      %734 = vmatprep.subr.mxu0 0.0
      %735 = vmatpush2.msra.mxu0 0.0
      %736 = vmatprep.subr.mxu0 0.0
      %737 = vmatpush2.msra.mxu0 0.0
      %738 = vmatprep.subr.mxu0 0.0
      %739 = vmatpush2.msra.mxu0 0.0
      %740 = vmatprep.mubr.f32.mxu0 0.0
      %741 = vmatmul.mubr.f32.gmra.mxu0 %v650
      %v742 = vpop.f32.mrf.mxu0
      %v743 = vadd.f32 %v639, %v742
      %v744 = vpop.f32.mrf.mxu0
      %745 = vmatprep.mubr.f32.mxu0 0.0
      %746 = vmatmul.mubr.f32.gmra.mxu0 %v653
      %v747 = vpop.f32.mrf.mxu0
      %v748 = vadd.f32 %v640, %v747
      %v749 = vpop.f32.mrf.mxu0
      %750 = vmatprep.mubr.f32.mxu0 0.0
      %751 = vmatmul.mubr.f32.gmra.mxu0 %v656
      %v752 = vpop.f32.mrf.mxu0
      %v753 = vadd.f32 %v641, %v752
      %v754 = vpop.f32.mrf.mxu0
      %755 = vmatprep.mubr.f32.mxu0 0.0
      %756 = vmatmul.mubr.f32.gmra.mxu0 %v659
      %v757 = vpop.f32.mrf.mxu0
      %v758 = vadd.f32 %v642, %v757
      %v759 = vpop.f32.mrf.mxu0
      %760 = vmatprep.mubr.f32.mxu0 0.0
      %761 = vmatmul.mubr.f32.gmra.mxu0 %v662
      %v762 = vpop.f32.mrf.mxu0
      %v763 = vadd.f32 %v643, %v762
      %v764 = vpop.f32.mrf.mxu0
      %765 = vmatprep.mubr.f32.mxu0 0.0
      %766 = vmatmul.mubr.f32.gmra.mxu0 %v665
      %v767 = vpop.f32.mrf.mxu0
      %v768 = vadd.f32 %v644, %v767
      %v769 = vpop.f32.mrf.mxu0
      %770 = vmatprep.mubr.f32.mxu0 0.0
      %771 = vmatmul.mubr.f32.gmra.mxu0 %v668
      %v772 = vpop.f32.mrf.mxu0
      %v773 = vadd.f32 %v645, %v772
      %v774 = vpop.f32.mrf.mxu0
      %775 = vmatprep.mubr.f32.mxu0 0.0
      %776 = vmatmul.mubr.f32.gmra.mxu0 %v671
      %v777 = vpop.f32.mrf.mxu0
      %v778 = vadd.f32 %v646, %v777
      %v779 = vpop.f32.mrf.mxu0
      %780 = vmatprep.mubr.f32.mxu0 0.0
      %781 = vmatmul.mubr.f32.gmra.mxu0 %v674
      %v782 = vpop.f32.mrf.mxu0
      %v783 = vadd.f32 %v647, %v782
      %v784 = vpop.f32.mrf.mxu0
      %785 = vdwg.mxu0
      %v786 = vld [vmem:[%s8] sm:$0x1]
      %v788 = vlaneseq
      %v789 = vshrl.u32 %v788, 7
      %v790 = vsub.s32 0, %v789
      %v791 = vrot.slane %v786, %v790
      %v793 = vadd.f32 %v743, %v791
      %v794 = vadd.f32 %v748, %v791
      %v795 = vadd.f32 %v753, %v791
      %v796 = vadd.f32 %v758, %v791
      %v797 = vadd.f32 %v763, %v791
      %v798 = vadd.f32 %v768, %v791
      %v799 = vadd.f32 %v773, %v791
      %v800 = vadd.f32 %v778, %v791
      %v801 = vadd.f32 %v783, %v791
      %v802 = vmax.f32 %v793, 0.0
      %v803 = vmax.f32 %v794, 0.0
      %v804 = vmax.f32 %v795, 0.0
      %v805 = vmax.f32 %v796, 0.0
      %v806 = vmax.f32 %v797, 0.0
      %v807 = vmax.f32 %v798, 0.0
      %v808 = vmax.f32 %v799, 0.0
      %v809 = vmax.f32 %v800, 0.0
      %v810 = vmax.f32 %v801, 0.0
      %v811 = vpack.c.bf16 %v803, %v802
      %v812 = vpack.c.bf16 %v805, %v804
      %v813 = vpack.c.bf16 %v807, %v806
      %v814 = vpack.c.bf16 %v809, %v808
      %v815 = vpack.c.bf16 %v810, %v810
      %v816 = vld [vmem:[%s9] sm:$0xf]
      %v817 = vld [vmem:[%s9 + $0x4] sm:$0xf]
      %v818 = vld [vmem:[%s9 + $0x8] sm:$0xf]
      %v819 = vld [vmem:[%s9 + $0xc] sm:$0xf]
      %v820 = vld [vmem:[%s9 + $0x10] sm:$0xf]
      %v821 = vld [vmem:[%s9 + $0x14] sm:$0xf]
      %v822 = vld [vmem:[%s9 + $0x18] sm:$0xf]
      %v823 = vld [vmem:[%s9 + $0x1c] sm:$0xf]
      %v824 = vld [vmem:[%s9 + $0x20] sm:$0xf]
      %v825 = vld [vmem:[%s9 + $0x24] sm:$0xf]
      %v826 = vld [vmem:[%s9 + $0x28] sm:$0xf]
      %v827 = vld [vmem:[%s9 + $0x2c] sm:$0xf]
      %v828 = vld [vmem:[%s9 + $0x30] sm:$0xf]
      %v829 = vld [vmem:[%s9 + $0x34] sm:$0xf]
      %v830 = vld [vmem:[%s9 + $0x38] sm:$0xf]
      %v831 = vld [vmem:[%s9 + $0x3c] sm:$0xf]
      %v832 = vld [vmem:[%s10] sm:$0x1]
      %v834 = vlaneseq
      %v835 = vshrl.u32 %v834, 7
      %v836 = vsub.s32 0, %v835
      %v837 = vrot.slane %v832, %v836
      %v855 = vunpack.c.l.b16 %v816
      %v856 = vunpack.c.l.b16 %v817
      %v857 = vunpack.c.l.b16 %v818
      %v858 = vunpack.c.l.b16 %v819
      %v859 = vunpack.c.l.b16 %v820
      %v860 = vunpack.c.l.b16 %v821
      %v861 = vunpack.c.l.b16 %v822
      %v862 = vunpack.c.l.b16 %v823
      %v863 = vunpack.c.l.b16 %v824
      %v864 = vunpack.c.l.b16 %v825
      %v865 = vunpack.c.l.b16 %v826
      %v866 = vunpack.c.l.b16 %v827
      %v867 = vunpack.c.l.b16 %v828
      %v868 = vunpack.c.l.b16 %v829
      %v869 = vunpack.c.l.b16 %v830
      %v870 = vunpack.c.l.b16 %v831
      %v871 = vpack.c.b16 %v856, %v855
      %v872 = vpack.c.b16 %v858, %v857
      %v873 = vpack.c.b16 %v860, %v859
      %v874 = vpack.c.b16 %v862, %v861
      %v875 = vpack.c.b16 %v864, %v863
      %v876 = vpack.c.b16 %v866, %v865
      %v877 = vpack.c.b16 %v868, %v867
      %v878 = vpack.c.b16 %v870, %v869
      %887 = vmatprep.subr.bf16.mxu0 0
      %888 = vmatpush1.bf16.msra.mxu0 %v878
      %889 = vmatprep.subr.bf16.mxu0 0
      %890 = vmatpush1.bf16.msra.mxu0 %v877
      %891 = vmatprep.subr.bf16.mxu0 0
      %892 = vmatpush1.bf16.msra.mxu0 %v876
      %893 = vmatprep.subr.bf16.mxu0 0
      %894 = vmatpush1.bf16.msra.mxu0 %v875
      %895 = vmatprep.subr.bf16.mxu0 0
      %896 = vmatpush1.bf16.msra.mxu0 %v874
      %897 = vmatprep.subr.bf16.mxu0 0
      %898 = vmatpush1.bf16.msra.mxu0 %v873
      %899 = vmatprep.subr.bf16.mxu0 0
      %900 = vmatpush1.bf16.msra.mxu0 %v872
      %901 = vmatprep.subr.bf16.mxu0 0
      %902 = vmatpush1.bf16.msra.mxu0 %v871
      %903 = vmatprep.subr.bf16.mxu0 0
      %904 = vmatpush2.bf16.msra.mxu0 0
      %905 = vmatprep.subr.bf16.mxu0 0
      %906 = vmatpush2.bf16.msra.mxu0 0
      %907 = vmatprep.subr.bf16.mxu0 0
      %908 = vmatpush2.bf16.msra.mxu0 0
      %909 = vmatprep.subr.bf16.mxu0 0
      %910 = vmatpush2.bf16.msra.mxu0 0
      %911 = vmatprep.subr.bf16.mxu0 0
      %912 = vmatpush2.bf16.msra.mxu0 0
      %913 = vmatprep.subr.bf16.mxu0 0
      %914 = vmatpush2.bf16.msra.mxu0 0
      %915 = vmatprep.subr.bf16.mxu0 0
      %916 = vmatpush2.bf16.msra.mxu0 0
      %917 = vmatprep.subr.bf16.mxu0 0
      %918 = vmatpush2.bf16.msra.mxu0 0
      %919 = vmatprep.mubr.bf16.mxu0 0
      %920 = vmatmul.mubr.bf16.gmra.mxu0 %v811
      %v921 = vpop.f32.mrf.mxu0
      %v922 = vadd.f32 %v837, %v921
      %v923 = vpop.f32.mrf.mxu0
      %v924 = vpop.f32.mrf.mxu0
      %v925 = vadd.f32 %v837, %v924
      %v926 = vpop.f32.mrf.mxu0
      %927 = vmatprep.mubr.bf16.mxu0 0
      %928 = vmatmul.mubr.bf16.gmra.mxu0 %v812
      %v929 = vpop.f32.mrf.mxu0
      %v930 = vadd.f32 %v837, %v929
      %v931 = vpop.f32.mrf.mxu0
      %v932 = vpop.f32.mrf.mxu0
      %v933 = vadd.f32 %v837, %v932
      %v934 = vpop.f32.mrf.mxu0
      %935 = vmatprep.mubr.bf16.mxu0 0
      %936 = vmatmul.mubr.bf16.gmra.mxu0 %v813
      %v937 = vpop.f32.mrf.mxu0
      %v938 = vadd.f32 %v837, %v937
      %v939 = vpop.f32.mrf.mxu0
      %v940 = vpop.f32.mrf.mxu0
      %v941 = vadd.f32 %v837, %v940
      %v942 = vpop.f32.mrf.mxu0
      %943 = vmatprep.mubr.bf16.mxu0 0
      %944 = vmatmul.mubr.bf16.gmra.mxu0 %v814
      %v945 = vpop.f32.mrf.mxu0
      %v946 = vadd.f32 %v837, %v945
      %v947 = vpop.f32.mrf.mxu0
      %v948 = vpop.f32.mrf.mxu0
      %v949 = vadd.f32 %v837, %v948
      %v950 = vpop.f32.mrf.mxu0
      %951 = vmatprep.mubr.bf16.mxu0 0
      %952 = vmatmul.mubr.bf16.gmra.mxu0 %v815
      %v953 = vpop.f32.mrf.mxu0
      %v954 = vadd.f32 %v837, %v953
      %v955 = vpop.f32.mrf.mxu0
      %v956 = vpop.f32.mrf.mxu0
      %v957 = vpop.f32.mrf.mxu0
      %958 = vdwg.mxu0
      %v959 = vmax.f32 %v922, 0.0
      %v960 = vmax.f32 %v925, 0.0
      %v961 = vmax.f32 %v930, 0.0
      %v962 = vmax.f32 %v933, 0.0
      %v963 = vmax.f32 %v938, 0.0
      %v964 = vmax.f32 %v941, 0.0
      %v965 = vmax.f32 %v946, 0.0
      %v966 = vmax.f32 %v949, 0.0
      %v967 = vmax.f32 %v954, 0.0
      %v968 = vld [vmem:[%s11] sm:$0x1]
      %v970 = vlaneseq
      %v971 = vshrl.u32 %v970, 7
      %v972 = vsub.s32 0, %v971
      %v973 = vrot.slane %v968, %v972
      %v975 = vmul.f32 %v959, %v973
      %v976 = vmul.f32 %v960, %v973
      %v977 = vmul.f32 %v961, %v973
      %v978 = vmul.f32 %v962, %v973
      %v979 = vmul.f32 %v963, %v973
      %v980 = vmul.f32 %v964, %v973
      %v981 = vmul.f32 %v965, %v973
      %v982 = vmul.f32 %v966, %v973
      %v983 = vmul.f32 %v967, %v973
      %984 = vadd.xlane.f32.xlu0 %v975
      %v985 = vpop.xlane.xlu0 %984
      %986 = vadd.xlane.f32.xlu0 %v976
      %v987 = vpop.xlane.xlu0 %986
      %988 = vadd.xlane.f32.xlu0 %v977
      %v989 = vpop.xlane.xlu0 %988
      %990 = vadd.xlane.f32.xlu0 %v978
      %v991 = vpop.xlane.xlu0 %990
      %992 = vadd.xlane.f32.xlu0 %v979
      %v993 = vpop.xlane.xlu0 %992
      %994 = vadd.xlane.f32.xlu0 %v980
      %v995 = vpop.xlane.xlu0 %994
      %996 = vadd.xlane.f32.xlu0 %v981
      %v997 = vpop.xlane.xlu0 %996
      %998 = vadd.xlane.f32.xlu0 %v982
      %v999 = vpop.xlane.xlu0 %998
      %1000 = vadd.xlane.f32.xlu0 %v983
      %v1001 = vpop.xlane.xlu0 %1000
      %v1002 = vld [vmem:[#allocation2] sm:$0x1]
      %v1004 = vlaneseq
      %v1005 = vshrl.u32 %v1004, 7
      %v1006 = vsub.s32 0, %v1005
      %v1007 = vrot.slane %v1002, %v1006
      %v1009 = vadd.f32 %v985, %v1007
      %v1010 = vadd.f32 %v987, %v1007
      %v1011 = vadd.f32 %v989, %v1007
      %v1012 = vadd.f32 %v991, %v1007
      %v1013 = vadd.f32 %v993, %v1007
      %v1014 = vadd.f32 %v995, %v1007
      %v1015 = vadd.f32 %v997, %v1007
      %v1016 = vadd.f32 %v999, %v1007
      %v1017 = vadd.f32 %v1001, %v1007
      %v1018 = vsub.f32 %v569, 1.0
      %v1019 = vsub.f32 %v570, 1.0
      %v1020 = vsub.f32 %v571, 1.0
      %v1021 = vsub.f32 %v572, 1.0
      %v1022 = vsub.f32 %v573, 1.0
      %v1023 = vsub.f32 %v574, 1.0
      %v1024 = vsub.f32 %v575, 1.0
      %v1025 = vsub.f32 %v576, 1.0
      %v1026 = vsub.f32 %v577, 1.0
      %v1027 = vmul.f32 %v1018, 1e+30
      %v1028 = vmul.f32 %v1019, 1e+30
      %v1029 = vmul.f32 %v1020, 1e+30
      %v1030 = vmul.f32 %v1021, 1e+30
      %v1031 = vmul.f32 %v1022, 1e+30
      %v1032 = vmul.f32 %v1023, 1e+30
      %v1033 = vmul.f32 %v1024, 1e+30
      %v1034 = vmul.f32 %v1025, 1e+30
      %v1035 = vmul.f32 %v1026, 1e+30
      %1037 = vset.pattern.permute.xlu0 0
      %1038 = vperm.xlu0 %1037, %v1009
      %v1039 = vpop.permute.xlu0 %1038
      %1042 = vset.pattern.permute.xlu0 0
      %1043 = vperm.xlu0 %1042, %v1010
      %v1044 = vpop.permute.xlu0 %1043
      %1047 = vset.pattern.permute.xlu0 0
      %1048 = vperm.xlu0 %1047, %v1011
      %v1049 = vpop.permute.xlu0 %1048
      %1052 = vset.pattern.permute.xlu0 0
      %1053 = vperm.xlu0 %1052, %v1012
      %v1054 = vpop.permute.xlu0 %1053
      %1057 = vset.pattern.permute.xlu0 0
      %1058 = vperm.xlu0 %1057, %v1013
      %v1059 = vpop.permute.xlu0 %1058
      %1062 = vset.pattern.permute.xlu0 0
      %1063 = vperm.xlu0 %1062, %v1014
      %v1064 = vpop.permute.xlu0 %1063
      %1067 = vset.pattern.permute.xlu0 0
      %1068 = vperm.xlu0 %1067, %v1015
      %v1069 = vpop.permute.xlu0 %1068
      %1072 = vset.pattern.permute.xlu0 0
      %1073 = vperm.xlu0 %1072, %v1016
      %v1074 = vpop.permute.xlu0 %1073
      %1077 = vset.pattern.permute.xlu0 0
      %1078 = vperm.xlu0 %1077, %v1017
      %v1079 = vpop.permute.xlu0 %1078
      %v1081 = vadd.f32 %v1039, %v1027
      %v1082 = vadd.f32 %v1044, %v1028
      %v1083 = vadd.f32 %v1049, %v1029
      %v1084 = vadd.f32 %v1054, %v1030
      %v1085 = vadd.f32 %v1059, %v1031
      %v1086 = vadd.f32 %v1064, %v1032
      %v1087 = vadd.f32 %v1069, %v1033
      %v1088 = vadd.f32 %v1074, %v1034
      %v1089 = vadd.f32 %v1079, %v1035
      %v1090 = vsel %vm648, %v1081, -inf
      %v1091 = vsel %vm648, %v1082, -inf
      %v1092 = vsel %vm648, %v1083, -inf
      %v1093 = vsel %vm648, %v1084, -inf
      %v1094 = vsel %vm648, %v1085, -inf
      %v1095 = vmax.f32 %v1090, %v1094
      %v1096 = vsel %vm648, %v1086, -inf
      %v1097 = vmax.f32 %v1091, %v1096
      %v1098 = vsel %vm648, %v1087, -inf
      %v1099 = vmax.f32 %v1092, %v1098
      %v1100 = vsel %vm648, %v1088, -inf
      %v1101 = vmax.f32 %v1093, %v1100
      %v1102 = vsel %vm648, %v1089, -inf
      %v1103 = vmax.f32 %v1095, %v1102
      %v1104 = vmax.f32 %v1103, %v1097
      %v1105 = vmax.f32 %v1099, %v1101
      %v1106 = vmax.f32 %v1104, %v1105
      %v1107 = vrot.slane %v1106, 4
      %v1108 = vmax.f32 %v1106, %v1107
      %v1109 = vrot.slane %v1108, 2
      %v1110 = vmax.f32 %v1108, %v1109
      %v1111 = vrot.slane %v1110, 1
      %v1112 = vmax.f32 %v1110, %v1111
      %v1113 = vmul.f32 %v569, %v1112
      %v1114 = vmul.f32 %v570, %v1112
      %v1115 = vmul.f32 %v571, %v1112
      %v1116 = vmul.f32 %v572, %v1112
      %v1117 = vmul.f32 %v573, %v1112
      %v1118 = vmul.f32 %v574, %v1112
      %v1119 = vmul.f32 %v575, %v1112
      %v1120 = vmul.f32 %v576, %v1112
      %v1121 = vmul.f32 %v577, %v1112
      %v1122 = vsel %vm648, %v1113, 0.0
      %1123 = vadd.xlane.f32.xlu0 %v1122
      %v1124 = vpop.xlane.xlu0 %1123
      %v1125 = vsel %vm648, %v1114, 0.0
      %1126 = vadd.xlane.f32.xlu0 %v1125
      %v1127 = vpop.xlane.xlu0 %1126
      %v1128 = vsel %vm648, %v1115, 0.0
      %1129 = vadd.xlane.f32.xlu0 %v1128
      %v1130 = vpop.xlane.xlu0 %1129
      %v1131 = vsel %vm648, %v1116, 0.0
      %1132 = vadd.xlane.f32.xlu0 %v1131
      %v1133 = vpop.xlane.xlu0 %1132
      %v1134 = vsel %vm648, %v1117, 0.0
      %1135 = vadd.xlane.f32.xlu0 %v1134
      %v1136 = vpop.xlane.xlu0 %1135
      %v1137 = vsel %vm648, %v1118, 0.0
      %1138 = vadd.xlane.f32.xlu0 %v1137
      %v1139 = vpop.xlane.xlu0 %1138
      %v1140 = vsel %vm648, %v1119, 0.0
      %1141 = vadd.xlane.f32.xlu0 %v1140
      %v1142 = vpop.xlane.xlu0 %1141
      %v1143 = vsel %vm648, %v1120, 0.0
      %1144 = vadd.xlane.f32.xlu0 %v1143
      %v1145 = vpop.xlane.xlu0 %1144
      %v1146 = vsel %vm648, %v1121, 0.0
      %1147 = vadd.xlane.f32.xlu0 %v1146
      %v1148 = vpop.xlane.xlu0 %1147
      %v1149 = vsub.f32 %v1009, %v1124
      %v1150 = vsub.f32 %v1010, %v1127
      %v1151 = vsub.f32 %v1011, %v1130
      %v1152 = vsub.f32 %v1012, %v1133
      %v1153 = vsub.f32 %v1013, %v1136
      %v1154 = vsub.f32 %v1014, %v1139
      %v1155 = vsub.f32 %v1015, %v1142
      %v1156 = vsub.f32 %v1016, %v1145
      %v1157 = vsub.f32 %v1017, %v1148
      %v1158 = vmul.f32 %v1149, 1.442695
      %v1159 = vpow.pop %v1158
      %v1160 = vmul.f32 %v1150, 1.442695
      %v1161 = vpow.pop %v1160
      %v1162 = vmul.f32 %v1151, 1.442695
      %v1163 = vpow.pop %v1162
      %v1164 = vmul.f32 %v1152, 1.442695
      %v1165 = vpow.pop %v1164
      %v1166 = vmul.f32 %v1153, 1.442695
      %v1167 = vpow.pop %v1166
      %v1168 = vmul.f32 %v1154, 1.442695
      %v1169 = vpow.pop %v1168
      %v1170 = vmul.f32 %v1155, 1.442695
      %v1171 = vpow.pop %v1170
      %v1172 = vmul.f32 %v1156, 1.442695
      %v1173 = vpow.pop %v1172
      %v1174 = vmul.f32 %v1157, 1.442695
      %v1175 = vpow.pop %v1174
      %v1176 = vld [vmem:[%s4] sm:$0xff]
      %vm1177 = vcmask 588800
      %v1179 = vsel %vm1177, %v1176, 0
      %1181 = vmatprep.subr.mxu0 0.0
      %1182 = vmatpush1.msra.mxu0 0.0
      %1183 = vmatprep.subr.mxu0 0.0
      %1184 = vmatpush1.msra.mxu0 0.0
      %1185 = vmatprep.subr.mxu0 0.0
      %1186 = vmatpush1.msra.mxu0 0.0
      %1187 = vmatprep.subr.mxu0 0.0
      %1188 = vmatpush1.msra.mxu0 0.0
      %1189 = vmatprep.subr.mxu0 0.0
      %1190 = vmatpush1.msra.mxu0 0.0
      %1191 = vmatprep.subr.mxu0 0.0
      %1192 = vmatpush1.msra.mxu0 0.0
      %1193 = vmatprep.subr.mxu0 0.0
      %1194 = vmatpush1.msra.mxu0 0.0
      %1195 = vmatprep.subr.mxu0 0.0
      %1196 = vmatpush1.msra.mxu0 %v1175
      %1197 = vmatprep.subr.mxu0 0.0
      %1198 = vmatpush1.msra.mxu0 %v1173
      %1199 = vmatprep.subr.mxu0 0.0
      %1200 = vmatpush1.msra.mxu0 %v1171
      %1201 = vmatprep.subr.mxu0 0.0
      %1202 = vmatpush1.msra.mxu0 %v1169
      %1203 = vmatprep.subr.mxu0 0.0
      %1204 = vmatpush1.msra.mxu0 %v1167
      %1205 = vmatprep.subr.mxu0 0.0
      %1206 = vmatpush1.msra.mxu0 %v1165
      %1207 = vmatprep.subr.mxu0 0.0
      %1208 = vmatpush1.msra.mxu0 %v1163
      %1209 = vmatprep.subr.mxu0 0.0
      %1210 = vmatpush1.msra.mxu0 %v1161
      %1211 = vmatprep.subr.mxu0 0.0
      %1212 = vmatpush1.msra.mxu0 %v1159
      %1213 = vmatprep.subr.mxu0 0.0
      %1214 = vmatpush2.msra.mxu0 0.0
      %1215 = vmatprep.subr.mxu0 0.0
      %1216 = vmatpush2.msra.mxu0 0.0
      %1217 = vmatprep.subr.mxu0 0.0
      %1218 = vmatpush2.msra.mxu0 0.0
      %1219 = vmatprep.subr.mxu0 0.0
      %1220 = vmatpush2.msra.mxu0 0.0
      %1221 = vmatprep.subr.mxu0 0.0
      %1222 = vmatpush2.msra.mxu0 0.0
      %1223 = vmatprep.subr.mxu0 0.0
      %1224 = vmatpush2.msra.mxu0 0.0
      %1225 = vmatprep.subr.mxu0 0.0
      %1226 = vmatpush2.msra.mxu0 0.0
      %1227 = vmatprep.subr.mxu0 0.0
      %1228 = vmatpush2.msra.mxu0 0.0
      %1229 = vmatprep.subr.mxu0 0.0
      %1230 = vmatpush2.msra.mxu0 0.0
      %1231 = vmatprep.subr.mxu0 0.0
      %1232 = vmatpush2.msra.mxu0 0.0
      %1233 = vmatprep.subr.mxu0 0.0
      %1234 = vmatpush2.msra.mxu0 0.0
      %1235 = vmatprep.subr.mxu0 0.0
      %1236 = vmatpush2.msra.mxu0 0.0
      %1237 = vmatprep.subr.mxu0 0.0
      %1238 = vmatpush2.msra.mxu0 0.0
      %1239 = vmatprep.subr.mxu0 0.0
      %1240 = vmatpush2.msra.mxu0 0.0
      %1241 = vmatprep.subr.mxu0 0.0
      %1242 = vmatpush2.msra.mxu0 0.0
      %1243 = vmatprep.subr.mxu0 0.0
      %1244 = vmatpush2.msra.mxu0 0.0
      %1245 = vmatprep.mubr.f32.mxu0 0.0
      %1246 = vmatmul.mubr.f32.gmra.mxu0 %v1179
      %v1247 = vpop.f32.mrf.mxu0
      %v1248 = vadd.f32 0.0, %v1247
      %v1249 = vpop.f32.mrf.mxu0
      %1250 = vdwg.mxu0
      %v1251 = vld [vmem:[%s5] sm:$0xff]
      %v1253 = vsel %vm1177, %v1251, 0
      %1255 = vmatprep.subr.mxu0 0.0
      %1256 = vmatpush1.msra.mxu0 0.0
      %1257 = vmatprep.subr.mxu0 0.0
      %1258 = vmatpush1.msra.mxu0 0.0
      %1259 = vmatprep.subr.mxu0 0.0
      %1260 = vmatpush1.msra.mxu0 0.0
      %1261 = vmatprep.subr.mxu0 0.0
      %1262 = vmatpush1.msra.mxu0 0.0
      %1263 = vmatprep.subr.mxu0 0.0
      %1264 = vmatpush1.msra.mxu0 0.0
      %1265 = vmatprep.subr.mxu0 0.0
      %1266 = vmatpush1.msra.mxu0 0.0
      %1267 = vmatprep.subr.mxu0 0.0
      %1268 = vmatpush1.msra.mxu0 0.0
      %1269 = vmatprep.subr.mxu0 0.0
      %1270 = vmatpush1.msra.mxu0 %v1175
      %1271 = vmatprep.subr.mxu0 0.0
      %1272 = vmatpush1.msra.mxu0 %v1173
      %1273 = vmatprep.subr.mxu0 0.0
      %1274 = vmatpush1.msra.mxu0 %v1171
      %1275 = vmatprep.subr.mxu0 0.0
      %1276 = vmatpush1.msra.mxu0 %v1169
      %1277 = vmatprep.subr.mxu0 0.0
      %1278 = vmatpush1.msra.mxu0 %v1167
      %1279 = vmatprep.subr.mxu0 0.0
      %1280 = vmatpush1.msra.mxu0 %v1165
      %1281 = vmatprep.subr.mxu0 0.0
      %1282 = vmatpush1.msra.mxu0 %v1163
      %1283 = vmatprep.subr.mxu0 0.0
      %1284 = vmatpush1.msra.mxu0 %v1161
      %1285 = vmatprep.subr.mxu0 0.0
      %1286 = vmatpush1.msra.mxu0 %v1159
      %1287 = vmatprep.subr.mxu0 0.0
      %1288 = vmatpush2.msra.mxu0 0.0
      %1289 = vmatprep.subr.mxu0 0.0
      %1290 = vmatpush2.msra.mxu0 0.0
      %1291 = vmatprep.subr.mxu0 0.0
      %1292 = vmatpush2.msra.mxu0 0.0
      %1293 = vmatprep.subr.mxu0 0.0
      %1294 = vmatpush2.msra.mxu0 0.0
      %1295 = vmatprep.subr.mxu0 0.0
      %1296 = vmatpush2.msra.mxu0 0.0
      %1297 = vmatprep.subr.mxu0 0.0
      %1298 = vmatpush2.msra.mxu0 0.0
      %1299 = vmatprep.subr.mxu0 0.0
      %1300 = vmatpush2.msra.mxu0 0.0
      %1301 = vmatprep.subr.mxu0 0.0
      %1302 = vmatpush2.msra.mxu0 0.0
      %1303 = vmatprep.subr.mxu0 0.0
      %1304 = vmatpush2.msra.mxu0 0.0
      %1305 = vmatprep.subr.mxu0 0.0
      %1306 = vmatpush2.msra.mxu0 0.0
      %1307 = vmatprep.subr.mxu0 0.0
      %1308 = vmatpush2.msra.mxu0 0.0
      %1309 = vmatprep.subr.mxu0 0.0
      %1310 = vmatpush2.msra.mxu0 0.0
      %1311 = vmatprep.subr.mxu0 0.0
      %1312 = vmatpush2.msra.mxu0 0.0
      %1313 = vmatprep.subr.mxu0 0.0
      %1314 = vmatpush2.msra.mxu0 0.0
      %1315 = vmatprep.subr.mxu0 0.0
      %1316 = vmatpush2.msra.mxu0 0.0
      %1317 = vmatprep.subr.mxu0 0.0
      %1318 = vmatpush2.msra.mxu0 0.0
      %1319 = vmatprep.mubr.f32.mxu0 0.0
      %1320 = vmatmul.mubr.f32.gmra.mxu0 %v1253
      %v1321 = vpop.f32.mrf.mxu0
      %v1322 = vadd.f32 0.0, %v1321
      %v1323 = vpop.f32.mrf.mxu0
      %1324 = vdwg.mxu0
      %v1325 = vmul.f32 %v1248, 8.0
      %v1326 = vrcp.pop %v1322
      %v1327 = vmul.f32 %v1325, %v1326
      %vm1328 = vcmask 7168
      %1329 = vst.msk [vmem:[%s476] sm:$0xff] %vm1328, %v1327
      %p1330 = scmp.lt.s32.totalorder %s26, 1
      %s1331 = scalar_select %p1330, %s26, 1
      %s1332 = smul.addr %s1331, 8
      %s1333 = scalar_lea.vmem %s13, %s1332
      // Predicated region
      $region73: #{tpu_custom_call.1} parent=71 // pred_check
        %p1334 = pneg %p332
      $region74: #{tpu_custom_call.1} parent=71 // pred_check_branch
        %1336 = sbr.rel (%p1334) target = $region76
      $region75: #{tpu_custom_call.1} parent=71 // pred_region
        _
      $region76: #{tpu_custom_call.1} parent=71 // pred_fallthru
        _
    $region72: #{tpu_custom_call.1} parent=5 // pred_fallthru
      _
    %p1337 = scmp.le.s32.totalorder 2, %s21
    // Predicated region
    $region77: #{tpu_custom_call.1} parent=5 // pred_check
      %p1338 = pneg %p1337
    $region78: #{tpu_custom_call.1} parent=5 // pred_check_branch
      %1340 = sbr.rel (%p1338) target = $region80
    $region79: #{tpu_custom_call.1} parent=5 // pred_region
      %s1341 = ssub.s32 %s21, 2
      // Predicated region
      $region81: #{tpu_custom_call.1} parent=79 // pred_check
        %p1342 = pneg %p338
      $region82: #{tpu_custom_call.1} parent=79 // pred_check_branch
        %1344 = sbr.rel (%p1342) target = $region84
      $region83: #{tpu_custom_call.1} parent=79 // pred_region
        %p1345 = scmp.lt.s32.totalorder %s27, 1
        %s1346 = scalar_select %p1345, %s27, 1
        %s1347 = smul.addr %s1346, 8
        %s1348 = scalar_lea.vmem %s13, %s1347
      $region84: #{tpu_custom_call.1} parent=79 // pred_fallthru
        _
    $region80: #{tpu_custom_call.1} parent=5 // pred_fallthru
      _
  $region6: #{tpu_custom_call.1} parent=0 // loop_footer
    %s25 = sadd.s32 1, %s21
  $region7: #{tpu_custom_call.1} parent=0 // loop_footer_branch
    %20 = sbr.rel target = $region3
  $region8: #{tpu_custom_call.1} parent=0 // loop_exit
    _

</llo_original>
